<compile_context>
chip_gen: v6e
topology: v6e:2x2x1
jax: 0.10.0
libtpu: 0.0.40
codegen_flags: <defaults>
</compile_context>

<pallas_src>
import numpy as np
import jax
import jax.numpy as jnp
from jax.experimental import pallas as pl
from jax.experimental.pallas import tpu as pltpu

# ----- logical (module) hyperparameters, scaled down --------------------------
VOCAB = 64
BLOCK_SIZE = 16          # max context length
N_EMBD = 32
N_HEAD = 4
N_LAYER = 2
HEAD = N_EMBD // N_HEAD  # 8
HID = 4 * N_EMBD         # 128 (exactly one lane tile)
EPS = 1e-5               # nn.LayerNorm default

# ----- TPU-padded dims (lane axis = multiples of 128) -------------------------
LANE = 128
CP = 128                 # padded embedding dim
VP = 128                 # padded vocab dim
W_COLS = 6 * LANE        # packed weight slab columns: [wq | wk | wv | wo | w1 | w2]
_WQKV, _WO, _W1, _W2 = 0, 3 * LANE, 4 * LANE, 5 * LANE
# bias / LayerNorm slab rows
_LN1G, _LN1B, _LN2G, _LN2B, _BO, _B1, _B2 = range(7)
NEG_INF = -1e30          # finite masked-score value (avoids -inf - -inf = NaN)


# ------------------------------ Pallas kernel ---------------------------------

def gpt_kernel(x_ref, w_ref, bv_ref, wlm_ref, fv_ref,
               hm_ref, bias_ref, blk_ref, o_ref):
    """GPT forward for one batch tile; weights resident in VMEM across grid steps."""
    Bt, T, _ = x_ref.shape
    R = Bt * T
    M = N_HEAD * T                                      # flattened (head, key) axis
    x = x_ref[...].reshape(R, CP)                       # f32 residual stream; lanes>=N_EMBD are 0

    # hoisted constants
    lane = jax.lax.broadcasted_iota(jnp.int32, (1, CP), 1)
    cmask = (lane < N_EMBD).astype(jnp.float32)         # (1, CP) real-lane mask for LN
    inv_c = 1.0 / N_EMBD
    scale = HEAD ** -0.5
    head_mask = hm_ref[...]                             # (M, N_EMBD): 1 where channel belongs to head m//T
    attn_bias = bias_ref[...]                           # (T, M) additive causal mask (0 / -1e30)
    blk_ones = blk_ref[...]                             # (M, M): 1 where same head

    def layernorm(v, g, b):
        # padded lanes of v are zero; mask + explicit 1/N_EMBD divisor keep stats exact
        mu = jnp.sum(v, axis=-1, keepdims=True) * inv_c
        d = (v - mu) * cmask
        var = jnp.sum(d * d, axis=-1, keepdims=True) * inv_c
        return d * jax.lax.rsqrt(var + EPS) * g + b

    for l in range(N_LAYER):                            # static unroll; TODO(synk): move to a
        bv = bv_ref[l]                                  # streamed grid axis at real model sizes

        # ---- attention: x = x + Wo(MHA(LN1(x))) + bo -------------------------
        xn = layernorm(x, bv[_LN1G:_LN1G + 1, :], bv[_LN1B:_LN1B + 1, :])
        qkv = jnp.dot(xn.astype(jnp.bfloat16), w_ref[l, :, _WQKV:_WQKV + 3 * LANE],
                      preferred_element_type=jnp.float32)               # (R, 384) f32
        q3 = qkv[:, 0 * LANE:0 * LANE + N_EMBD].reshape(Bt, T, N_EMBD)  # 128-aligned 32-wide slices
        k3 = qkv[:, 1 * LANE:1 * LANE + N_EMBD].reshape(Bt, T, N_EMBD)
        v3 = qkv[:, 2 * LANE:2 * LANE + N_EMBD].reshape(Bt, T, N_EMBD)

        # all heads at once: replicate K/V along m = h*T + k and mask block-diagonally
        km = jnp.concatenate([k3] * N_HEAD, axis=1) * head_mask         # (Bt, M, N_EMBD)
        vm = jnp.concatenate([v3] * N_HEAD, axis=1) * head_mask         # (Bt, M, N_EMBD)
        s = jnp.einsum('bqc,bmc->bqm', q3, km,
                       preferred_element_type=jnp.float32) * scale + attn_bias
        # row-global max == same shift within each head group -> per-head softmax unchanged
        s = s - jnp.max(s, axis=-1, keepdims=True)
        p = jnp.exp(s).reshape(R, M)
        den = jnp.dot(p, blk_ones, preferred_element_type=jnp.float32)  # per-head sums, broadcast
        p = (p * pl.reciprocal(den, approx=True)).reshape(Bt, T, M)     # EUP divide
        out = jnp.einsum('bqm,bmc->bqc', p, vm,
                         preferred_element_type=jnp.float32)            # (Bt, T, N_EMBD), merged heads
        sa = jnp.dot(out.reshape(R, N_EMBD).astype(jnp.bfloat16),
                     w_ref[l, :N_EMBD, _WO:_WO + LANE],
                     preferred_element_type=jnp.float32)                # (R, CP)
        x = x + sa + bv[_BO:_BO + 1, :]

        # ---- MLP: x = x + W2(relu(W1(LN2(x)) + b1)) + b2 ---------------------
        xn2 = layernorm(x, bv[_LN2G:_LN2G + 1, :], bv[_LN2B:_LN2B + 1, :])
        h1 = jnp.maximum(
            jnp.dot(xn2.astype(jnp.bfloat16), w_ref[l, :, _W1:_W1 + LANE],
                    preferred_element_type=jnp.float32) + bv[_B1:_B1 + 1, :], 0.0)
        ff = jnp.dot(h1.astype(jnp.bfloat16), w_ref[l, :, _W2:_W2 + LANE],
                     preferred_element_type=jnp.float32) + bv[_B2:_B2 + 1, :]
        x = x + ff

    # ---- final LayerNorm + lm_head (lane-dense 128-wide store) ---------------
    fv = fv_ref[...]                                    # (8, CP): [lnf_g, lnf_b, blm, 0...]
    xnf = layernorm(x, fv[0:1, :], fv[1:2, :])
    logits = jnp.dot(xnf.astype(jnp.bfloat16), wlm_ref[...],
                     preferred_element_type=jnp.float32) + fv[2:3, :]
    o_ref[...] = logits.reshape(Bt, T, VP)


# --------------------------------- wrapper ------------------------------------

def _attn_constants(T):
    """Host-built attention-structure constants (trace-time, tiny)."""
    M = N_HEAD * T
    m = np.arange(M)
    head_of_m = m // T
    head_of_c = np.arange(N_EMBD) // HEAD
    head_mask = (head_of_m[:, None] == head_of_c[None, :]).astype(np.float32)   # (M, N_EMBD)
    k_of_m = m % T
    attn_bias = np.where(np.arange(T)[:, None] >= k_of_m[None, :],
                         0.0, NEG_INF).astype(np.float32)                        # (T, M)
    blk_ones = (head_of_m[:, None] == head_of_m[None, :]).astype(np.float32)     # (M, M)
    return jnp.asarray(head_mask), jnp.asarray(attn_bias), jnp.asarray(blk_ones)


@jax.jit
def gpt_forward(idx, kp):
    """Forward with targets=None (logits only)."""
    B, T = idx.shape
    M = N_HEAD * T
    # token + position embedding gather (plain-JAX glue; tables pre-padded to CP lanes)
    x0 = (kp['tok_emb'][idx] + kp['pos_emb'][:T]).astype(jnp.float32)   # (B, T, CP)
    head_mask, attn_bias, blk_ones = _attn_constants(T)

    logits_p = pl.pallas_call(
        gpt_kernel,
        out_shape=jax.ShapeDtypeStruct((B, T, VP), jnp.float32),
        grid=(B,),                                       # batch tile = 1: parallel across TCs on v7x
        in_specs=[
            pl.BlockSpec((1, T, CP), lambda b: (b, 0, 0)),
            pl.BlockSpec((N_LAYER, CP, W_COLS), lambda b: (0, 0, 0)),   # constant maps: weights stay
            pl.BlockSpec((N_LAYER, 8, CP), lambda b: (0, 0, 0)),        # resident across grid steps
            pl.BlockSpec((CP, VP), lambda b: (0, 0)),
            pl.BlockSpec((8, CP), lambda b: (0, 0)),
            pl.BlockSpec((M, N_EMBD), lambda b: (0, 0)),
            pl.BlockSpec((T, M), lambda b: (0, 0)),
            pl.BlockSpec((M, M), lambda b: (0, 0)),
        ],
        out_specs=pl.BlockSpec((1, T, VP), lambda b: (b, 0, 0)),
        compiler_params=pltpu.CompilerParams(dimension_semantics=("parallel",)),
    )(x0, kp['w_slab'], kp['b_slab'], kp['wlm'], kp['fin'],
      head_mask, attn_bias, blk_ones)
    # un-pad: (B, T, VP) -> (B, T, VOCAB)
    return logits_p[:, :, :VOCAB]
    # TODO(synk): cross-entropy loss (targets path) and generate()'s multinomial
    # sampling are host/XLA-level control flow, not kernel hot paths; omitted.


# --------------------------- parameter init / packing --------------------------

def _pad2(w, rows, cols):
    return jnp.zeros((rows, cols), jnp.float32).at[:w.shape[0], :w.shape[1]].set(w)


def _pad1(v, n):
    return jnp.zeros((n,), jnp.float32).at[:v.shape[0]].set(v)


def init_logical_params(key):
    """Same init as the PyTorch module: N(0, 0.02) weights/embeddings, zero biases."""
    keys = jax.random.split(key, 3 + N_LAYER)
    normal = lambda k, shape: 0.02 * jax.random.normal(k, shape, jnp.float32)
    p = {
        'tok_emb': normal(keys[0], (VOCAB, N_EMBD)),
        'pos_emb': normal(keys[1], (BLOCK_SIZE, N_EMBD)),
        'lnfg': jnp.ones((N_EMBD,), jnp.float32),
        'lnfb': jnp.zeros((N_EMBD,), jnp.float32),
        'wlm': normal(keys[2], (N_EMBD, VOCAB)),
        'blm': jnp.zeros((VOCAB,), jnp.float32),
        'layers': [],
    }
    for l in range(N_LAYER):
        lk = jax.random.split(keys[3 + l], 6)
        p['layers'].append({
            'ln1g': jnp.ones((N_EMBD,), jnp.float32),
            'ln1b': jnp.zeros((N_EMBD,), jnp.float32),
            'wq': normal(lk[0], (N_EMBD, N_EMBD)),
            'wk': normal(lk[1], (N_EMBD, N_EMBD)),
            'wv': normal(lk[2], (N_EMBD, N_EMBD)),
            'wo': normal(lk[3], (N_EMBD, N_EMBD)),
            'bo': jnp.zeros((N_EMBD,), jnp.float32),
            'ln2g': jnp.ones((N_EMBD,), jnp.float32),
            'ln2b': jnp.zeros((N_EMBD,), jnp.float32),
            'w1': normal(lk[4], (N_EMBD, HID)),
            'b1': jnp.zeros((HID,), jnp.float32),
            'w2': normal(lk[5], (HID, N_EMBD)),
            'b2': jnp.zeros((N_EMBD,), jnp.float32),
        })
    return p


def pack_params(p):
    """Zero-pad to 128 lanes and pack per-layer params into a few large slabs.
    Matmul weights are stored bf16 (halves weight DMA, bf16 MXU); LN/bias slabs
    stay f32 (elementwise path).  Padded lanes are exactly zero -> load-bearing
    invariant for LayerNorm / residual correctness."""
    w_slabs, b_slabs = [], []
    for L in p['layers']:
        w_slabs.append(jnp.concatenate(
            [_pad2(L['wq'], CP, LANE), _pad2(L['wk'], CP, LANE), _pad2(L['wv'], CP, LANE),
             _pad2(L['wo'], CP, LANE), _pad2(L['w1'], CP, LANE), _pad2(L['w2'], CP, LANE)],
            axis=1))                                                    # (CP, 6*128)
        b_slabs.append(jnp.stack(
            [_pad1(L['ln1g'], CP), _pad1(L['ln1b'], CP),
             _pad1(L['ln2g'], CP), _pad1(L['ln2b'], CP),
             _pad1(L['bo'], CP), _pad1(L['b1'], CP), _pad1(L['b2'], CP),
             jnp.zeros((CP,), jnp.float32)]))                           # (8, CP)
    fin = jnp.stack([_pad1(p['lnfg'], CP), _pad1(p['lnfb'], CP), _pad1(p['blm'], CP)]
                    + [jnp.zeros((CP,), jnp.float32)] * 5)              # (8, CP)
    return {
        'tok_emb': _pad2(p['tok_emb'], VOCAB, CP),
        'pos_emb': _pad2(p['pos_emb'], BLOCK_SIZE, CP),
        'w_slab': jnp.stack(w_slabs).astype(jnp.bfloat16),   # (N_LAYER, CP, 6*128) bf16
        'b_slab': jnp.stack(b_slabs),                        # (N_LAYER, 8, CP) f32
        'wlm': _pad2(p['wlm'], CP, VP).astype(jnp.bfloat16), # (CP, VP) bf16
        'fin': fin,                                          # (8, CP) f32
    }


# ----------------------------- pure-JAX reference ------------------------------

def ref_forward(idx, p):
    T = idx.shape[1]
    x = p['tok_emb'][idx] + p['pos_emb'][:T]
    causal = jnp.tril(jnp.ones((T, T), bool))

    def ln(v, g, b):
        mu = jnp.mean(v, -1, keepdims=True)
        var = jnp.mean((v - mu) ** 2, -1, keepdims=True)
        return (v - mu) * jax.lax.rsqrt(var + EPS) * g + b

    for L in p['layers']:
        xn = ln(x, L['ln1g'], L['ln1b'])
        q, k, v = xn @ L['wq'], xn @ L['wk'], xn @ L['wv']
        heads = []
        for h in range(N_HEAD):
            sl = slice(h * HEAD, (h + 1) * HEAD)
            s = (q[..., sl] @ jnp.swapaxes(k[..., sl], -1, -2)) * (HEAD ** -0.5)
            s = jnp.where(causal, s, -jnp.inf)
            heads.append(jax.nn.softmax(s, -1) @ v[..., sl])
        x = x + jnp.concatenate(heads, -1) @ L['wo'] + L['bo']
        xn2 = ln(x, L['ln2g'], L['ln2b'])
        x = x + jnp.maximum(xn2 @ L['w1'] + L['b1'], 0.0) @ L['w2'] + L['b2']
    xn = ln(x, p['lnfg'], p['lnfb'])
    return xn @ p['wlm'] + p['blm']


if __name__ == "__main__":
    key = jax.random.PRNGKey(0)
    pkey, ikey = jax.random.split(key)
    logical = init_logical_params(pkey)
    kparams = pack_params(logical)

    B, T = 2, 8
    idx = jax.random.randint(ikey, (B, T), 0, VOCAB, dtype=jnp.int32)

    logits = gpt_forward(idx, kparams)
    jax.block_until_ready(logits)
    assert logits.shape == (B, T, VOCAB) and logits.dtype == jnp.float32

    ref = ref_forward(idx, logical)
    # tolerance reflects bf16 weight/matmul operands (f32 reference semantics otherwise)
    np.testing.assert_allclose(np.asarray(logits), np.asarray(ref),
                               rtol=2e-2, atol=2e-2)
    print("KERNEL_OK")
</pallas_src>

<mosaic_0001>
module attributes {stable_mosaic.version = 11 : i64} {
  func.func @gpt_kernel(%arg0: i32, %arg1: memref<1x8x128xf32, #tpu.memory_space<vmem>>, %arg2: memref<2x128x768xbf16, #tpu.memory_space<vmem>>, %arg3: memref<2x8x128xf32, #tpu.memory_space<vmem>>, %arg4: memref<128x128xbf16, #tpu.memory_space<vmem>>, %arg5: memref<8x128xf32, #tpu.memory_space<vmem>>, %arg6: memref<32x32xf32, #tpu.memory_space<vmem>>, %arg7: memref<8x32xf32, #tpu.memory_space<vmem>>, %arg8: memref<32x32xf32, #tpu.memory_space<vmem>>, %arg9: memref<1x8x128xf32, #tpu.memory_space<vmem>>) attributes {dimension_semantics = [#tpu.dimension_semantics<parallel>], iteration_bounds = array<i64: 2>, scalar_prefetch = 0 : i64, scratch_operands = 0 : i64, tpu.core_type = #tpu.core_type<tc>, window_params = [{transform_indices = @transform_0, window_bounds = array<i64: 1, 8, 128>}, {pipeline_mode = #tpu.pipeline_mode<synchronous>, transform_indices = @transform_1, window_bounds = array<i64: 2, 128, 768>}, {pipeline_mode = #tpu.pipeline_mode<synchronous>, transform_indices = @transform_2, window_bounds = array<i64: 2, 8, 128>}, {pipeline_mode = #tpu.pipeline_mode<synchronous>, transform_indices = @transform_3, window_bounds = array<i64: 128, 128>}, {pipeline_mode = #tpu.pipeline_mode<synchronous>, transform_indices = @transform_4, window_bounds = array<i64: 8, 128>}, {pipeline_mode = #tpu.pipeline_mode<synchronous>, transform_indices = @transform_5, window_bounds = array<i64: 32, 32>}, {pipeline_mode = #tpu.pipeline_mode<synchronous>, transform_indices = @transform_6, window_bounds = array<i64: 8, 32>}, {pipeline_mode = #tpu.pipeline_mode<synchronous>, transform_indices = @transform_7, window_bounds = array<i64: 32, 32>}, {transform_indices = @transform_8, window_bounds = array<i64: 1, 8, 128>}]} {
    %c0 = arith.constant 0 : index
    %c0_0 = arith.constant 0 : index
    %c0_1 = arith.constant 0 : index
    %0 = vector.load %arg1[%c0, %c0_0, %c0_1] : memref<1x8x128xf32, #tpu.memory_space<vmem>>, vector<1x8x128xf32>
    %1 = vector.shape_cast %0 : vector<1x8x128xf32> to vector<8x128xf32>
    %2 = tpu.iota {dimensions = array<i32: 1>} : vector<1x128xi32>
    %c32_i32 = arith.constant 32 : i32
    %3 = vector.broadcast %c32_i32 : i32 to vector<1x128xi32>
    %4 = arith.cmpi slt, %2, %3 : vector<1x128xi32>
    %5 = arith.extui %4 : vector<1x128xi1> to vector<1x128xi32>
    %6 = arith.sitofp %5 : vector<1x128xi32> to vector<1x128xf32>
    %c0_2 = arith.constant 0 : index
    %c0_3 = arith.constant 0 : index
    %7 = vector.load %arg6[%c0_2, %c0_3] : memref<32x32xf32, #tpu.memory_space<vmem>>, vector<32x32xf32>
    %c0_4 = arith.constant 0 : index
    %c0_5 = arith.constant 0 : index
    %8 = vector.load %arg7[%c0_4, %c0_5] : memref<8x32xf32, #tpu.memory_space<vmem>>, vector<8x32xf32>
    %c0_6 = arith.constant 0 : index
    %c0_7 = arith.constant 0 : index
    %9 = vector.load %arg8[%c0_6, %c0_7] : memref<32x32xf32, #tpu.memory_space<vmem>>, vector<32x32xf32>
    %c0_8 = arith.constant 0 : index
    %c0_9 = arith.constant 0 : index
    %c0_10 = arith.constant 0 : index
    %10 = vector.load %arg3[%c0_8, %c0_9, %c0_10] : memref<2x8x128xf32, #tpu.memory_space<vmem>>, vector<1x8x128xf32>
    %11 = vector.shape_cast %10 : vector<1x8x128xf32> to vector<8x128xf32>
    %12 = vector.extract_strided_slice %11 {offsets = [0, 0], sizes = [1, 128], strides = [1, 1]} : vector<8x128xf32> to vector<1x128xf32>
    %13 = vector.extract_strided_slice %11 {offsets = [1, 0], sizes = [1, 128], strides = [1, 1]} : vector<8x128xf32> to vector<1x128xf32>
    %cst = arith.constant dense<0.000000e+00> : vector<8xf32>
    %14 = vector.multi_reduction <add>, %1, %cst [1] : vector<8x128xf32> to vector<8xf32>
    %15 = vector.shape_cast %14 : vector<8xf32> to vector<8x1xf32>
    %cst_11 = arith.constant 3.125000e-02 : f32
    %16 = vector.broadcast %cst_11 : f32 to vector<8x1xf32>
    %17 = arith.mulf %15, %16 : vector<8x1xf32>
    %18 = vector.broadcast %17 : vector<8x1xf32> to vector<8x128xf32>
    %19 = arith.subf %1, %18 : vector<8x128xf32>
    %20 = vector.broadcast %6 : vector<1x128xf32> to vector<8x128xf32>
    %21 = arith.mulf %19, %20 : vector<8x128xf32>
    %22 = arith.mulf %21, %21 : vector<8x128xf32>
    %cst_12 = arith.constant dense<0.000000e+00> : vector<8xf32>
    %23 = vector.multi_reduction <add>, %22, %cst_12 [1] : vector<8x128xf32> to vector<8xf32>
    %24 = vector.shape_cast %23 : vector<8xf32> to vector<8x1xf32>
    %cst_13 = arith.constant 3.125000e-02 : f32
    %25 = vector.broadcast %cst_13 : f32 to vector<8x1xf32>
    %26 = arith.mulf %24, %25 : vector<8x1xf32>
    %cst_14 = arith.constant 9.99999974E-6 : f32
    %27 = vector.broadcast %cst_14 : f32 to vector<8x1xf32>
    %28 = arith.addf %26, %27 : vector<8x1xf32>
    %29 = math.rsqrt %28 : vector<8x1xf32>
    %30 = vector.broadcast %29 : vector<8x1xf32> to vector<8x128xf32>
    %31 = arith.mulf %21, %30 : vector<8x128xf32>
    %32 = vector.broadcast %12 : vector<1x128xf32> to vector<8x128xf32>
    %33 = arith.mulf %31, %32 : vector<8x128xf32>
    %34 = vector.broadcast %13 : vector<1x128xf32> to vector<8x128xf32>
    %35 = arith.addf %33, %34 : vector<8x128xf32>
    %36 = arith.truncf %35 : vector<8x128xf32> to vector<8x128xbf16>
    %c0_15 = arith.constant 0 : index
    %c0_16 = arith.constant 0 : index
    %c0_17 = arith.constant 0 : index
    %37 = vector.load %arg2[%c0_15, %c0_16, %c0_17] : memref<2x128x768xbf16, #tpu.memory_space<vmem>>, vector<1x128x384xbf16>
    %38 = vector.shape_cast %37 : vector<1x128x384xbf16> to vector<128x384xbf16>
    %cst_18 = arith.constant dense<0.000000e+00> : vector<8x384xf32>
    %39 = tpu.matmul %36, %38, %cst_18 {dimension_numbers = #tpu.dot_dimension_numbers<[1], [0], [0], [1], [0, 0, 1, 1], [], []>} : vector<8x128xbf16>, vector<128x384xbf16>, vector<8x384xf32> -> vector<8x384xf32>
    %40 = vector.extract_strided_slice %39 {offsets = [0, 0], sizes = [8, 32], strides = [1, 1]} : vector<8x384xf32> to vector<8x32xf32>
    %41 = vector.shape_cast %40 : vector<8x32xf32> to vector<1x8x32xf32>
    %42 = vector.extract_strided_slice %39 {offsets = [0, 128], sizes = [8, 32], strides = [1, 1]} : vector<8x384xf32> to vector<8x32xf32>
    %43 = vector.shape_cast %42 : vector<8x32xf32> to vector<1x8x32xf32>
    %44 = vector.extract_strided_slice %39 {offsets = [0, 256], sizes = [8, 32], strides = [1, 1]} : vector<8x384xf32> to vector<8x32xf32>
    %45 = vector.shape_cast %44 : vector<8x32xf32> to vector<1x8x32xf32>
    %46 = tpu.concatenate %43, %43, %43, %43 in 1 : vector<1x8x32xf32>, vector<1x8x32xf32>, vector<1x8x32xf32>, vector<1x8x32xf32> -> vector<1x32x32xf32>
    %47 = vector.shape_cast %7 : vector<32x32xf32> to vector<1x32x32xf32>
    %48 = arith.mulf %46, %47 : vector<1x32x32xf32>
    %49 = tpu.concatenate %45, %45, %45, %45 in 1 : vector<1x8x32xf32>, vector<1x8x32xf32>, vector<1x8x32xf32>, vector<1x8x32xf32> -> vector<1x32x32xf32>
    %50 = vector.shape_cast %7 : vector<32x32xf32> to vector<1x32x32xf32>
    %51 = arith.mulf %49, %50 : vector<1x32x32xf32>
    "tpu.trace_start"() <{level = 10 : i32, message = "bqc,bmc->bqm"}> : () -> ()
    %cst_19 = arith.constant dense<0.000000e+00> : vector<1x8x32xf32>
    %52 = tpu.matmul %41, %48, %cst_19 {dimension_numbers = #tpu.dot_dimension_numbers<[2], [2], [1], [1], [0, 0, 0, 1, 1, 1], [0], [0]>} : vector<1x8x32xf32>, vector<1x32x32xf32>, vector<1x8x32xf32> -> vector<1x8x32xf32>
    "tpu.trace_stop"() : () -> ()
    %cst_20 = arith.constant 0.353553385 : f32
    %53 = vector.broadcast %cst_20 : f32 to vector<1x8x32xf32>
    %54 = arith.mulf %52, %53 : vector<1x8x32xf32>
    %55 = vector.shape_cast %8 : vector<8x32xf32> to vector<1x8x32xf32>
    %56 = arith.addf %54, %55 : vector<1x8x32xf32>
    %cst_21 = arith.constant dense<0xFF800000> : vector<1x8xf32>
    %57 = vector.multi_reduction <maximumf>, %56, %cst_21 [2] : vector<1x8x32xf32> to vector<1x8xf32>
    %58 = vector.shape_cast %57 : vector<1x8xf32> to vector<1x8x1xf32>
    %59 = vector.broadcast %58 : vector<1x8x1xf32> to vector<1x8x32xf32>
    %60 = arith.subf %56, %59 : vector<1x8x32xf32>
    %61 = math.exp %60 : vector<1x8x32xf32>
    %62 = vector.shape_cast %61 : vector<1x8x32xf32> to vector<8x32xf32>
    %cst_22 = arith.constant dense<0.000000e+00> : vector<8x32xf32>
    %63 = tpu.matmul %62, %9, %cst_22 {dimension_numbers = #tpu.dot_dimension_numbers<[1], [0], [0], [1], [0, 0, 1, 1], [], []>} : vector<8x32xf32>, vector<32x32xf32>, vector<8x32xf32> -> vector<8x32xf32>
    %64 = tpu.reciprocal %63 {approx = true} : vector<8x32xf32> -> vector<8x32xf32>
    %65 = arith.mulf %62, %64 : vector<8x32xf32>
    %66 = vector.shape_cast %65 : vector<8x32xf32> to vector<1x8x32xf32>
    "tpu.trace_start"() <{level = 10 : i32, message = "bqm,bmc->bqc"}> : () -> ()
    %cst_23 = arith.constant dense<0.000000e+00> : vector<1x8x32xf32>
    %67 = tpu.matmul %66, %51, %cst_23 {dimension_numbers = #tpu.dot_dimension_numbers<[2], [1], [1], [2], [0, 0, 0, 1, 1, 2], [0], [0]>} : vector<1x8x32xf32>, vector<1x32x32xf32>, vector<1x8x32xf32> -> vector<1x8x32xf32>
    "tpu.trace_stop"() : () -> ()
    %68 = vector.shape_cast %67 : vector<1x8x32xf32> to vector<8x32xf32>
    %69 = arith.truncf %68 : vector<8x32xf32> to vector<8x32xbf16>
    %c0_24 = arith.constant 0 : index
    %c0_25 = arith.constant 0 : index
    %c384 = arith.constant 384 : index
    %70 = vector.load %arg2[%c0_24, %c0_25, %c384] : memref<2x128x768xbf16, #tpu.memory_space<vmem>>, vector<1x32x128xbf16>
    %71 = vector.shape_cast %70 : vector<1x32x128xbf16> to vector<32x128xbf16>
    %cst_26 = arith.constant dense<0.000000e+00> : vector<8x128xf32>
    %72 = tpu.matmul %69, %71, %cst_26 {dimension_numbers = #tpu.dot_dimension_numbers<[1], [0], [0], [1], [0, 0, 1, 1], [], []>} : vector<8x32xbf16>, vector<32x128xbf16>, vector<8x128xf32> -> vector<8x128xf32>
    %73 = arith.addf %1, %72 : vector<8x128xf32>
    %74 = vector.extract_strided_slice %11 {offsets = [4, 0], sizes = [1, 128], strides = [1, 1]} : vector<8x128xf32> to vector<1x128xf32>
    %75 = vector.broadcast %74 : vector<1x128xf32> to vector<8x128xf32>
    %76 = arith.addf %73, %75 : vector<8x128xf32>
    %77 = vector.extract_strided_slice %11 {offsets = [2, 0], sizes = [1, 128], strides = [1, 1]} : vector<8x128xf32> to vector<1x128xf32>
    %78 = vector.extract_strided_slice %11 {offsets = [3, 0], sizes = [1, 128], strides = [1, 1]} : vector<8x128xf32> to vector<1x128xf32>
    %cst_27 = arith.constant dense<0.000000e+00> : vector<8xf32>
    %79 = vector.multi_reduction <add>, %76, %cst_27 [1] : vector<8x128xf32> to vector<8xf32>
    %80 = vector.shape_cast %79 : vector<8xf32> to vector<8x1xf32>
    %cst_28 = arith.constant 3.125000e-02 : f32
    %81 = vector.broadcast %cst_28 : f32 to vector<8x1xf32>
    %82 = arith.mulf %80, %81 : vector<8x1xf32>
    %83 = vector.broadcast %82 : vector<8x1xf32> to vector<8x128xf32>
    %84 = arith.subf %76, %83 : vector<8x128xf32>
    %85 = vector.broadcast %6 : vector<1x128xf32> to vector<8x128xf32>
    %86 = arith.mulf %84, %85 : vector<8x128xf32>
    %87 = arith.mulf %86, %86 : vector<8x128xf32>
    %cst_29 = arith.constant dense<0.000000e+00> : vector<8xf32>
    %88 = vector.multi_reduction <add>, %87, %cst_29 [1] : vector<8x128xf32> to vector<8xf32>
    %89 = vector.shape_cast %88 : vector<8xf32> to vector<8x1xf32>
    %cst_30 = arith.constant 3.125000e-02 : f32
    %90 = vector.broadcast %cst_30 : f32 to vector<8x1xf32>
    %91 = arith.mulf %89, %90 : vector<8x1xf32>
    %cst_31 = arith.constant 9.99999974E-6 : f32
    %92 = vector.broadcast %cst_31 : f32 to vector<8x1xf32>
    %93 = arith.addf %91, %92 : vector<8x1xf32>
    %94 = math.rsqrt %93 : vector<8x1xf32>
    %95 = vector.broadcast %94 : vector<8x1xf32> to vector<8x128xf32>
    %96 = arith.mulf %86, %95 : vector<8x128xf32>
    %97 = vector.broadcast %77 : vector<1x128xf32> to vector<8x128xf32>
    %98 = arith.mulf %96, %97 : vector<8x128xf32>
    %99 = vector.broadcast %78 : vector<1x128xf32> to vector<8x128xf32>
    %100 = arith.addf %98, %99 : vector<8x128xf32>
    %101 = arith.truncf %100 : vector<8x128xf32> to vector<8x128xbf16>
    %c0_32 = arith.constant 0 : index
    %c0_33 = arith.constant 0 : index
    %c512 = arith.constant 512 : index
    %102 = vector.load %arg2[%c0_32, %c0_33, %c512] : memref<2x128x768xbf16, #tpu.memory_space<vmem>>, vector<1x128x128xbf16>
    %103 = vector.shape_cast %102 : vector<1x128x128xbf16> to vector<128x128xbf16>
    %cst_34 = arith.constant dense<0.000000e+00> : vector<8x128xf32>
    %104 = tpu.matmul %101, %103, %cst_34 {dimension_numbers = #tpu.dot_dimension_numbers<[1], [0], [0], [1], [0, 0, 1, 1], [], []>} : vector<8x128xbf16>, vector<128x128xbf16>, vector<8x128xf32> -> vector<8x128xf32>
    %105 = vector.extract_strided_slice %11 {offsets = [5, 0], sizes = [1, 128], strides = [1, 1]} : vector<8x128xf32> to vector<1x128xf32>
    %106 = vector.broadcast %105 : vector<1x128xf32> to vector<8x128xf32>
    %107 = arith.addf %104, %106 : vector<8x128xf32>
    %cst_35 = arith.constant 0.000000e+00 : f32
    %108 = vector.broadcast %cst_35 : f32 to vector<8x128xf32>
    %109 = arith.maximumf %107, %108 : vector<8x128xf32>
    %110 = arith.truncf %109 : vector<8x128xf32> to vector<8x128xbf16>
    %c0_36 = arith.constant 0 : index
    %c0_37 = arith.constant 0 : index
    %c640 = arith.constant 640 : index
    %111 = vector.load %arg2[%c0_36, %c0_37, %c640] : memref<2x128x768xbf16, #tpu.memory_space<vmem>>, vector<1x128x128xbf16>
    %112 = vector.shape_cast %111 : vector<1x128x128xbf16> to vector<128x128xbf16>
    %cst_38 = arith.constant dense<0.000000e+00> : vector<8x128xf32>
    %113 = tpu.matmul %110, %112, %cst_38 {dimension_numbers = #tpu.dot_dimension_numbers<[1], [0], [0], [1], [0, 0, 1, 1], [], []>} : vector<8x128xbf16>, vector<128x128xbf16>, vector<8x128xf32> -> vector<8x128xf32>
    %114 = vector.extract_strided_slice %11 {offsets = [6, 0], sizes = [1, 128], strides = [1, 1]} : vector<8x128xf32> to vector<1x128xf32>
    %115 = vector.broadcast %114 : vector<1x128xf32> to vector<8x128xf32>
    %116 = arith.addf %113, %115 : vector<8x128xf32>
    %117 = arith.addf %76, %116 : vector<8x128xf32>
    %c1 = arith.constant 1 : index
    %c0_39 = arith.constant 0 : index
    %c0_40 = arith.constant 0 : index
    %118 = vector.load %arg3[%c1, %c0_39, %c0_40] : memref<2x8x128xf32, #tpu.memory_space<vmem>>, vector<1x8x128xf32>
    %119 = vector.shape_cast %118 : vector<1x8x128xf32> to vector<8x128xf32>
    %120 = vector.extract_strided_slice %119 {offsets = [0, 0], sizes = [1, 128], strides = [1, 1]} : vector<8x128xf32> to vector<1x128xf32>
    %121 = vector.extract_strided_slice %119 {offsets = [1, 0], sizes = [1, 128], strides = [1, 1]} : vector<8x128xf32> to vector<1x128xf32>
    %cst_41 = arith.constant dense<0.000000e+00> : vector<8xf32>
    %122 = vector.multi_reduction <add>, %117, %cst_41 [1] : vector<8x128xf32> to vector<8xf32>
    %123 = vector.shape_cast %122 : vector<8xf32> to vector<8x1xf32>
    %cst_42 = arith.constant 3.125000e-02 : f32
    %124 = vector.broadcast %cst_42 : f32 to vector<8x1xf32>
    %125 = arith.mulf %123, %124 : vector<8x1xf32>
    %126 = vector.broadcast %125 : vector<8x1xf32> to vector<8x128xf32>
    %127 = arith.subf %117, %126 : vector<8x128xf32>
    %128 = vector.broadcast %6 : vector<1x128xf32> to vector<8x128xf32>
    %129 = arith.mulf %127, %128 : vector<8x128xf32>
    %130 = arith.mulf %129, %129 : vector<8x128xf32>
    %cst_43 = arith.constant dense<0.000000e+00> : vector<8xf32>
    %131 = vector.multi_reduction <add>, %130, %cst_43 [1] : vector<8x128xf32> to vector<8xf32>
    %132 = vector.shape_cast %131 : vector<8xf32> to vector<8x1xf32>
    %cst_44 = arith.constant 3.125000e-02 : f32
    %133 = vector.broadcast %cst_44 : f32 to vector<8x1xf32>
    %134 = arith.mulf %132, %133 : vector<8x1xf32>
    %cst_45 = arith.constant 9.99999974E-6 : f32
    %135 = vector.broadcast %cst_45 : f32 to vector<8x1xf32>
    %136 = arith.addf %134, %135 : vector<8x1xf32>
    %137 = math.rsqrt %136 : vector<8x1xf32>
    %138 = vector.broadcast %137 : vector<8x1xf32> to vector<8x128xf32>
    %139 = arith.mulf %129, %138 : vector<8x128xf32>
    %140 = vector.broadcast %120 : vector<1x128xf32> to vector<8x128xf32>
    %141 = arith.mulf %139, %140 : vector<8x128xf32>
    %142 = vector.broadcast %121 : vector<1x128xf32> to vector<8x128xf32>
    %143 = arith.addf %141, %142 : vector<8x128xf32>
    %144 = arith.truncf %143 : vector<8x128xf32> to vector<8x128xbf16>
    %c1_46 = arith.constant 1 : index
    %c0_47 = arith.constant 0 : index
    %c0_48 = arith.constant 0 : index
    %145 = vector.load %arg2[%c1_46, %c0_47, %c0_48] : memref<2x128x768xbf16, #tpu.memory_space<vmem>>, vector<1x128x384xbf16>
    %146 = vector.shape_cast %145 : vector<1x128x384xbf16> to vector<128x384xbf16>
    %cst_49 = arith.constant dense<0.000000e+00> : vector<8x384xf32>
    %147 = tpu.matmul %144, %146, %cst_49 {dimension_numbers = #tpu.dot_dimension_numbers<[1], [0], [0], [1], [0, 0, 1, 1], [], []>} : vector<8x128xbf16>, vector<128x384xbf16>, vector<8x384xf32> -> vector<8x384xf32>
    %148 = vector.extract_strided_slice %147 {offsets = [0, 0], sizes = [8, 32], strides = [1, 1]} : vector<8x384xf32> to vector<8x32xf32>
    %149 = vector.shape_cast %148 : vector<8x32xf32> to vector<1x8x32xf32>
    %150 = vector.extract_strided_slice %147 {offsets = [0, 128], sizes = [8, 32], strides = [1, 1]} : vector<8x384xf32> to vector<8x32xf32>
    %151 = vector.shape_cast %150 : vector<8x32xf32> to vector<1x8x32xf32>
    %152 = vector.extract_strided_slice %147 {offsets = [0, 256], sizes = [8, 32], strides = [1, 1]} : vector<8x384xf32> to vector<8x32xf32>
    %153 = vector.shape_cast %152 : vector<8x32xf32> to vector<1x8x32xf32>
    %154 = tpu.concatenate %151, %151, %151, %151 in 1 : vector<1x8x32xf32>, vector<1x8x32xf32>, vector<1x8x32xf32>, vector<1x8x32xf32> -> vector<1x32x32xf32>
    %155 = vector.shape_cast %7 : vector<32x32xf32> to vector<1x32x32xf32>
    %156 = arith.mulf %154, %155 : vector<1x32x32xf32>
    %157 = tpu.concatenate %153, %153, %153, %153 in 1 : vector<1x8x32xf32>, vector<1x8x32xf32>, vector<1x8x32xf32>, vector<1x8x32xf32> -> vector<1x32x32xf32>
    %158 = vector.shape_cast %7 : vector<32x32xf32> to vector<1x32x32xf32>
    %159 = arith.mulf %157, %158 : vector<1x32x32xf32>
    "tpu.trace_start"() <{level = 10 : i32, message = "bqc,bmc->bqm"}> : () -> ()
    %cst_50 = arith.constant dense<0.000000e+00> : vector<1x8x32xf32>
    %160 = tpu.matmul %149, %156, %cst_50 {dimension_numbers = #tpu.dot_dimension_numbers<[2], [2], [1], [1], [0, 0, 0, 1, 1, 1], [0], [0]>} : vector<1x8x32xf32>, vector<1x32x32xf32>, vector<1x8x32xf32> -> vector<1x8x32xf32>
    "tpu.trace_stop"() : () -> ()
    %cst_51 = arith.constant 0.353553385 : f32
    %161 = vector.broadcast %cst_51 : f32 to vector<1x8x32xf32>
    %162 = arith.mulf %160, %161 : vector<1x8x32xf32>
    %163 = vector.shape_cast %8 : vector<8x32xf32> to vector<1x8x32xf32>
    %164 = arith.addf %162, %163 : vector<1x8x32xf32>
    %cst_52 = arith.constant dense<0xFF800000> : vector<1x8xf32>
    %165 = vector.multi_reduction <maximumf>, %164, %cst_52 [2] : vector<1x8x32xf32> to vector<1x8xf32>
    %166 = vector.shape_cast %165 : vector<1x8xf32> to vector<1x8x1xf32>
    %167 = vector.broadcast %166 : vector<1x8x1xf32> to vector<1x8x32xf32>
    %168 = arith.subf %164, %167 : vector<1x8x32xf32>
    %169 = math.exp %168 : vector<1x8x32xf32>
    %170 = vector.shape_cast %169 : vector<1x8x32xf32> to vector<8x32xf32>
    %cst_53 = arith.constant dense<0.000000e+00> : vector<8x32xf32>
    %171 = tpu.matmul %170, %9, %cst_53 {dimension_numbers = #tpu.dot_dimension_numbers<[1], [0], [0], [1], [0, 0, 1, 1], [], []>} : vector<8x32xf32>, vector<32x32xf32>, vector<8x32xf32> -> vector<8x32xf32>
    %172 = tpu.reciprocal %171 {approx = true} : vector<8x32xf32> -> vector<8x32xf32>
    %173 = arith.mulf %170, %172 : vector<8x32xf32>
    %174 = vector.shape_cast %173 : vector<8x32xf32> to vector<1x8x32xf32>
    "tpu.trace_start"() <{level = 10 : i32, message = "bqm,bmc->bqc"}> : () -> ()
    %cst_54 = arith.constant dense<0.000000e+00> : vector<1x8x32xf32>
    %175 = tpu.matmul %174, %159, %cst_54 {dimension_numbers = #tpu.dot_dimension_numbers<[2], [1], [1], [2], [0, 0, 0, 1, 1, 2], [0], [0]>} : vector<1x8x32xf32>, vector<1x32x32xf32>, vector<1x8x32xf32> -> vector<1x8x32xf32>
    "tpu.trace_stop"() : () -> ()
    %176 = vector.shape_cast %175 : vector<1x8x32xf32> to vector<8x32xf32>
    %177 = arith.truncf %176 : vector<8x32xf32> to vector<8x32xbf16>
    %c1_55 = arith.constant 1 : index
    %c0_56 = arith.constant 0 : index
    %c384_57 = arith.constant 384 : index
    %178 = vector.load %arg2[%c1_55, %c0_56, %c384_57] : memref<2x128x768xbf16, #tpu.memory_space<vmem>>, vector<1x32x128xbf16>
    %179 = vector.shape_cast %178 : vector<1x32x128xbf16> to vector<32x128xbf16>
    %cst_58 = arith.constant dense<0.000000e+00> : vector<8x128xf32>
    %180 = tpu.matmul %177, %179, %cst_58 {dimension_numbers = #tpu.dot_dimension_numbers<[1], [0], [0], [1], [0, 0, 1, 1], [], []>} : vector<8x32xbf16>, vector<32x128xbf16>, vector<8x128xf32> -> vector<8x128xf32>
    %181 = arith.addf %117, %180 : vector<8x128xf32>
    %182 = vector.extract_strided_slice %119 {offsets = [4, 0], sizes = [1, 128], strides = [1, 1]} : vector<8x128xf32> to vector<1x128xf32>
    %183 = vector.broadcast %182 : vector<1x128xf32> to vector<8x128xf32>
    %184 = arith.addf %181, %183 : vector<8x128xf32>
    %185 = vector.extract_strided_slice %119 {offsets = [2, 0], sizes = [1, 128], strides = [1, 1]} : vector<8x128xf32> to vector<1x128xf32>
    %186 = vector.extract_strided_slice %119 {offsets = [3, 0], sizes = [1, 128], strides = [1, 1]} : vector<8x128xf32> to vector<1x128xf32>
    %cst_59 = arith.constant dense<0.000000e+00> : vector<8xf32>
    %187 = vector.multi_reduction <add>, %184, %cst_59 [1] : vector<8x128xf32> to vector<8xf32>
    %188 = vector.shape_cast %187 : vector<8xf32> to vector<8x1xf32>
    %cst_60 = arith.constant 3.125000e-02 : f32
    %189 = vector.broadcast %cst_60 : f32 to vector<8x1xf32>
    %190 = arith.mulf %188, %189 : vector<8x1xf32>
    %191 = vector.broadcast %190 : vector<8x1xf32> to vector<8x128xf32>
    %192 = arith.subf %184, %191 : vector<8x128xf32>
    %193 = vector.broadcast %6 : vector<1x128xf32> to vector<8x128xf32>
    %194 = arith.mulf %192, %193 : vector<8x128xf32>
    %195 = arith.mulf %194, %194 : vector<8x128xf32>
    %cst_61 = arith.constant dense<0.000000e+00> : vector<8xf32>
    %196 = vector.multi_reduction <add>, %195, %cst_61 [1] : vector<8x128xf32> to vector<8xf32>
    %197 = vector.shape_cast %196 : vector<8xf32> to vector<8x1xf32>
    %cst_62 = arith.constant 3.125000e-02 : f32
    %198 = vector.broadcast %cst_62 : f32 to vector<8x1xf32>
    %199 = arith.mulf %197, %198 : vector<8x1xf32>
    %cst_63 = arith.constant 9.99999974E-6 : f32
    %200 = vector.broadcast %cst_63 : f32 to vector<8x1xf32>
    %201 = arith.addf %199, %200 : vector<8x1xf32>
    %202 = math.rsqrt %201 : vector<8x1xf32>
    %203 = vector.broadcast %202 : vector<8x1xf32> to vector<8x128xf32>
    %204 = arith.mulf %194, %203 : vector<8x128xf32>
    %205 = vector.broadcast %185 : vector<1x128xf32> to vector<8x128xf32>
    %206 = arith.mulf %204, %205 : vector<8x128xf32>
    %207 = vector.broadcast %186 : vector<1x128xf32> to vector<8x128xf32>
    %208 = arith.addf %206, %207 : vector<8x128xf32>
    %209 = arith.truncf %208 : vector<8x128xf32> to vector<8x128xbf16>
    %c1_64 = arith.constant 1 : index
    %c0_65 = arith.constant 0 : index
    %c512_66 = arith.constant 512 : index
    %210 = vector.load %arg2[%c1_64, %c0_65, %c512_66] : memref<2x128x768xbf16, #tpu.memory_space<vmem>>, vector<1x128x128xbf16>
    %211 = vector.shape_cast %210 : vector<1x128x128xbf16> to vector<128x128xbf16>
    %cst_67 = arith.constant dense<0.000000e+00> : vector<8x128xf32>
    %212 = tpu.matmul %209, %211, %cst_67 {dimension_numbers = #tpu.dot_dimension_numbers<[1], [0], [0], [1], [0, 0, 1, 1], [], []>} : vector<8x128xbf16>, vector<128x128xbf16>, vector<8x128xf32> -> vector<8x128xf32>
    %213 = vector.extract_strided_slice %119 {offsets = [5, 0], sizes = [1, 128], strides = [1, 1]} : vector<8x128xf32> to vector<1x128xf32>
    %214 = vector.broadcast %213 : vector<1x128xf32> to vector<8x128xf32>
    %215 = arith.addf %212, %214 : vector<8x128xf32>
    %cst_68 = arith.constant 0.000000e+00 : f32
    %216 = vector.broadcast %cst_68 : f32 to vector<8x128xf32>
    %217 = arith.maximumf %215, %216 : vector<8x128xf32>
    %218 = arith.truncf %217 : vector<8x128xf32> to vector<8x128xbf16>
    %c1_69 = arith.constant 1 : index
    %c0_70 = arith.constant 0 : index
    %c640_71 = arith.constant 640 : index
    %219 = vector.load %arg2[%c1_69, %c0_70, %c640_71] : memref<2x128x768xbf16, #tpu.memory_space<vmem>>, vector<1x128x128xbf16>
    %220 = vector.shape_cast %219 : vector<1x128x128xbf16> to vector<128x128xbf16>
    %cst_72 = arith.constant dense<0.000000e+00> : vector<8x128xf32>
    %221 = tpu.matmul %218, %220, %cst_72 {dimension_numbers = #tpu.dot_dimension_numbers<[1], [0], [0], [1], [0, 0, 1, 1], [], []>} : vector<8x128xbf16>, vector<128x128xbf16>, vector<8x128xf32> -> vector<8x128xf32>
    %222 = vector.extract_strided_slice %119 {offsets = [6, 0], sizes = [1, 128], strides = [1, 1]} : vector<8x128xf32> to vector<1x128xf32>
    %223 = vector.broadcast %222 : vector<1x128xf32> to vector<8x128xf32>
    %224 = arith.addf %221, %223 : vector<8x128xf32>
    %225 = arith.addf %184, %224 : vector<8x128xf32>
    %c0_73 = arith.constant 0 : index
    %c0_74 = arith.constant 0 : index
    %226 = vector.load %arg5[%c0_73, %c0_74] : memref<8x128xf32, #tpu.memory_space<vmem>>, vector<8x128xf32>
    %227 = vector.extract_strided_slice %226 {offsets = [0, 0], sizes = [1, 128], strides = [1, 1]} : vector<8x128xf32> to vector<1x128xf32>
    %228 = vector.extract_strided_slice %226 {offsets = [1, 0], sizes = [1, 128], strides = [1, 1]} : vector<8x128xf32> to vector<1x128xf32>
    %cst_75 = arith.constant dense<0.000000e+00> : vector<8xf32>
    %229 = vector.multi_reduction <add>, %225, %cst_75 [1] : vector<8x128xf32> to vector<8xf32>
    %230 = vector.shape_cast %229 : vector<8xf32> to vector<8x1xf32>
    %cst_76 = arith.constant 3.125000e-02 : f32
    %231 = vector.broadcast %cst_76 : f32 to vector<8x1xf32>
    %232 = arith.mulf %230, %231 : vector<8x1xf32>
    %233 = vector.broadcast %232 : vector<8x1xf32> to vector<8x128xf32>
    %234 = arith.subf %225, %233 : vector<8x128xf32>
    %235 = vector.broadcast %6 : vector<1x128xf32> to vector<8x128xf32>
    %236 = arith.mulf %234, %235 : vector<8x128xf32>
    %237 = arith.mulf %236, %236 : vector<8x128xf32>
    %cst_77 = arith.constant dense<0.000000e+00> : vector<8xf32>
    %238 = vector.multi_reduction <add>, %237, %cst_77 [1] : vector<8x128xf32> to vector<8xf32>
    %239 = vector.shape_cast %238 : vector<8xf32> to vector<8x1xf32>
    %cst_78 = arith.constant 3.125000e-02 : f32
    %240 = vector.broadcast %cst_78 : f32 to vector<8x1xf32>
    %241 = arith.mulf %239, %240 : vector<8x1xf32>
    %cst_79 = arith.constant 9.99999974E-6 : f32
    %242 = vector.broadcast %cst_79 : f32 to vector<8x1xf32>
    %243 = arith.addf %241, %242 : vector<8x1xf32>
    %244 = math.rsqrt %243 : vector<8x1xf32>
    %245 = vector.broadcast %244 : vector<8x1xf32> to vector<8x128xf32>
    %246 = arith.mulf %236, %245 : vector<8x128xf32>
    %247 = vector.broadcast %227 : vector<1x128xf32> to vector<8x128xf32>
    %248 = arith.mulf %246, %247 : vector<8x128xf32>
    %249 = vector.broadcast %228 : vector<1x128xf32> to vector<8x128xf32>
    %250 = arith.addf %248, %249 : vector<8x128xf32>
    %251 = arith.truncf %250 : vector<8x128xf32> to vector<8x128xbf16>
    %c0_80 = arith.constant 0 : index
    %c0_81 = arith.constant 0 : index
    %252 = vector.load %arg4[%c0_80, %c0_81] : memref<128x128xbf16, #tpu.memory_space<vmem>>, vector<128x128xbf16>
    %cst_82 = arith.constant dense<0.000000e+00> : vector<8x128xf32>
    %253 = tpu.matmul %251, %252, %cst_82 {dimension_numbers = #tpu.dot_dimension_numbers<[1], [0], [0], [1], [0, 0, 1, 1], [], []>} : vector<8x128xbf16>, vector<128x128xbf16>, vector<8x128xf32> -> vector<8x128xf32>
    %254 = vector.extract_strided_slice %226 {offsets = [2, 0], sizes = [1, 128], strides = [1, 1]} : vector<8x128xf32> to vector<1x128xf32>
    %255 = vector.broadcast %254 : vector<1x128xf32> to vector<8x128xf32>
    %256 = arith.addf %253, %255 : vector<8x128xf32>
    %257 = vector.shape_cast %256 : vector<8x128xf32> to vector<1x8x128xf32>
    %c0_83 = arith.constant 0 : index
    %c0_84 = arith.constant 0 : index
    %c0_85 = arith.constant 0 : index
    %258 = vector.load %arg9[%c0_83, %c0_84, %c0_85] : memref<1x8x128xf32, #tpu.memory_space<vmem>>, vector<1x8x128xf32>
    tpu.vector_store %arg9[%c0_83, %c0_84, %c0_85], %257 {strides = array<i32>} : memref<1x8x128xf32, #tpu.memory_space<vmem>>, vector<1x8x128xf32>,
    return
  }
  func.func @transform_0(%arg0: i32) -> (i32, i32, i32) {
    %c0_i32 = arith.constant 0 : i32
    %c0_i32_0 = arith.constant 0 : i32
    %c0_i32_1 = arith.constant 0 : i32
    return %arg0, %c0_i32, %c0_i32_0 : i32, i32, i32
  }
  func.func @transform_1(%arg0: i32) -> (i32, i32, i32) {
    %c0_i32 = arith.constant 0 : i32
    %c0_i32_0 = arith.constant 0 : i32
    %c0_i32_1 = arith.constant 0 : i32
    %c0_i32_2 = arith.constant 0 : i32
    return %c0_i32, %c0_i32_0, %c0_i32_1 : i32, i32, i32
  }
  func.func @transform_2(%arg0: i32) -> (i32, i32, i32) {
    %c0_i32 = arith.constant 0 : i32
    %c0_i32_0 = arith.constant 0 : i32
    %c0_i32_1 = arith.constant 0 : i32
    %c0_i32_2 = arith.constant 0 : i32
    return %c0_i32, %c0_i32_0, %c0_i32_1 : i32, i32, i32
  }
  func.func @transform_3(%arg0: i32) -> (i32, i32) {
    %c0_i32 = arith.constant 0 : i32
    %c0_i32_0 = arith.constant 0 : i32
    %c0_i32_1 = arith.constant 0 : i32
    return %c0_i32, %c0_i32_0 : i32, i32
  }
  func.func @transform_4(%arg0: i32) -> (i32, i32) {
    %c0_i32 = arith.constant 0 : i32
    %c0_i32_0 = arith.constant 0 : i32
    %c0_i32_1 = arith.constant 0 : i32
    return %c0_i32, %c0_i32_0 : i32, i32
  }
  func.func @transform_5(%arg0: i32) -> (i32, i32) {
    %c0_i32 = arith.constant 0 : i32
    %c0_i32_0 = arith.constant 0 : i32
    %c0_i32_1 = arith.constant 0 : i32
    return %c0_i32, %c0_i32_0 : i32, i32
  }
  func.func @transform_6(%arg0: i32) -> (i32, i32) {
    %c0_i32 = arith.constant 0 : i32
    %c0_i32_0 = arith.constant 0 : i32
    %c0_i32_1 = arith.constant 0 : i32
    return %c0_i32, %c0_i32_0 : i32, i32
  }
  func.func @transform_7(%arg0: i32) -> (i32, i32) {
    %c0_i32 = arith.constant 0 : i32
    %c0_i32_0 = arith.constant 0 : i32
    %c0_i32_1 = arith.constant 0 : i32
    return %c0_i32, %c0_i32_0 : i32, i32
  }
  func.func @transform_8(%arg0: i32) -> (i32, i32, i32) {
    %c0_i32 = arith.constant 0 : i32
    %c0_i32_0 = arith.constant 0 : i32
    %c0_i32_1 = arith.constant 0 : i32
    return %arg0, %c0_i32, %c0_i32_0 : i32, i32, i32
  }
}

</mosaic_0001>

<llo_original>
// kernel: gpt_forward.1
$region0: #{gpt_forward.1}
  #allocation0 [shape = 'u32[]', space=smem, size = 0x4, offset = 0x4, fixed_abs, tag = 'smem constant byte address 0x4 - core index']
  #allocation1 [shape = 'u32[144,128]{1,0:T(1,128)}', space=vmem, size = 0x12000, scoped, tag = 'internal scratch']
  %s0 = inlined_call_operand.vmem [shape: f32[2,8,128], index: 0, kind: input, shape index: {}]
  %s1 = inlined_call_operand.hbm [shape: bf16[2,128,768], index: 1, kind: input, shape index: {}]
  %s2 = inlined_call_operand.vmem [shape: f32[2,8,128], index: 2, kind: input, shape index: {}]
  %s3 = inlined_call_operand.vmem [shape: bf16[128,128], index: 3, kind: input, shape index: {}]
  %s4 = inlined_call_operand.vmem [shape: f32[8,128], index: 4, kind: input, shape index: {}]
  %s5 = inlined_call_operand.vmem [shape: f32[32,32], index: 5, kind: input, shape index: {}, may-alias: {5,7}]
  %s6 = inlined_call_operand.vmem [shape: f32[8,32], index: 6, kind: input, shape index: {}]
  %s7 = inlined_call_operand.vmem [shape: f32[32,32], index: 7, kind: input, shape index: {}, may-alias: {5,7}]
  %s8 = inlined_call_operand.hbm [shape: f32[2,8,128], index: 8, kind: output, shape index: {}]
  %s9 = sld [smem:[#allocation0]]
  $region69: #{gpt_forward.1} parent=0
    _
  %s11 = ssub.s32 1, %s9
  %s12 = scalar_select 0, %s11, %s9
  $region1: #{gpt_forward.1} parent=0
    #allocation2 [shape = 'u8[393216]{0}', space=vmem, size = 0x60000, scoped, tag = 'input window, operand 1, single buffered']
    #allocation3 [shape = 's32[2]{0}', space=sflag, size = 0x8, scoped, tag = 'scoped memory for gpt_forward.1']
    #allocation4 [shape = 's32[2]{0}', space=sflag, size = 0x8, scoped, tag = 'scoped memory for gpt_forward.1']
    #allocation5 [shape = 'u8[8192]{0}', space=vmem, size = 0x2000, scoped, tag = 'output window, operand 0']
    %13 = vsyncpa [#allocation3], 0
    %14 = vsyncpa [#allocation4], 0
    %s15 = scalar_lea.sflag [#allocation4], 1
    %16 = vsyncpa %s15, 0
    loop: start=0, step=1, limit=4
    $region2: #{gpt_forward.1} parent=1 // loop_pre_header
      _
    $region3: #{gpt_forward.1} parent=1 // loop_header
      %s18 = sphi 0, %s22
      %p19 = scmp.ge.s32.totalorder %s18, 4
      %s28 = sphi 0, %s30
      %s31 = sphi 0, %s28
      %s32 = sphi 0, %s31
      %s48 = sphi 0, %s32
      %s52 = sphi 0, %s52
      %s54 = sphi 0, %s52
      %s55 = sphi 0, %s54
      %s69 = sphi 0, %s55
      %s73 = sphi 0, %s73
      %s75 = sphi 0, %s73
      %s76 = sphi 0, %s75
      %s90 = sphi 0, %s76
      %s94 = sphi 0, %s94
      %s96 = sphi 0, %s94
      %s97 = sphi 0, %s96
      %s111 = sphi 0, %s97
      %s115 = sphi 0, %s115
      %s117 = sphi 0, %s115
      %s118 = sphi 0, %s117
      %s132 = sphi 0, %s118
      %s136 = sphi 0, %s136
      %s138 = sphi 0, %s136
      %s139 = sphi 0, %s138
      %s153 = sphi 0, %s139
      %s157 = sphi 0, %s157
      %s159 = sphi 0, %s157
      %s160 = sphi 0, %s159
      %s174 = sphi 0, %s160
      %s178 = sphi 0, %s178
      %s180 = sphi 0, %s178
      %s181 = sphi 0, %s180
      %s195 = sphi 0, %s181
      %s201 = sphi 0, %s203
      %s204 = sphi 0, %s201
      %s205 = sphi 0, %s204
      %s221 = sphi 0, %s205
    $region4: #{gpt_forward.1} parent=1 // loop_header_branch
      %21 = sbr.rel (%p19) target = $region8
    $region5: #{gpt_forward.1} parent=1 // loop_body
      %s23 = ssub.s32 %s18, 1
      %s24 = ssub.s32 %s18, 2
      %s25 = sadd.s32 %s18, 1
      %s26 = ssub.s32 %s18, %s25
      %p27 = scmp.eq.s32.totalorder %s26, 0
      %s29 = sadd.s32 %s28, 1
      %s30 = scalar_select %p27, %s28, %s29
      %p33 = pneg %p27
      %p34 = scmp.eq.s32.totalorder %s18, 1
      %p35 = por %p33, %p34
      %p36 = scmp.ne.s32.totalorder %s28, %s31
      %p37 = scmp.eq.s32.totalorder %s18, 0
      %p38 = por %p36, %p37
      %p39 = scmp.ne.s32.totalorder %s28, %s31
      %p40 = scmp.eq.s32.totalorder %s23, 1
      %p41 = por %p39, %p40
      %p42 = scmp.ne.s32.totalorder %s31, %s32
      %p43 = scmp.eq.s32.totalorder %s23, 0
      %p44 = por %p42, %p43
      %p45 = scmp.ne.s32.totalorder %s31, %s32
      %p46 = scmp.eq.s32.totalorder %s24, 1
      %p47 = por %p45, %p46
      %p49 = scmp.ne.s32.totalorder %s32, %s48
      %p50 = scmp.eq.s32.totalorder %s24, 0
      %p51 = por %p49, %p50
      %s53 = sadd.s32 %s52, 1
      %p56 = scmp.eq.s32.totalorder %s18, 1
      %p57 = scmp.ne.s32.totalorder %s52, %s54
      %p58 = scmp.eq.s32.totalorder %s18, 0
      %p59 = por %p57, %p58
      %p60 = scmp.ne.s32.totalorder %s52, %s54
      %p61 = scmp.eq.s32.totalorder %s23, 1
      %p62 = por %p60, %p61
      %p63 = scmp.ne.s32.totalorder %s54, %s55
      %p64 = scmp.eq.s32.totalorder %s23, 0
      %p65 = por %p63, %p64
      %p66 = scmp.ne.s32.totalorder %s54, %s55
      %p67 = scmp.eq.s32.totalorder %s24, 1
      %p68 = por %p66, %p67
      %p70 = scmp.ne.s32.totalorder %s55, %s69
      %p71 = scmp.eq.s32.totalorder %s24, 0
      %p72 = por %p70, %p71
      %s74 = sadd.s32 %s73, 1
      %p77 = scmp.eq.s32.totalorder %s18, 1
      %p78 = scmp.ne.s32.totalorder %s73, %s75
      %p79 = scmp.eq.s32.totalorder %s18, 0
      %p80 = por %p78, %p79
      %p81 = scmp.ne.s32.totalorder %s73, %s75
      %p82 = scmp.eq.s32.totalorder %s23, 1
      %p83 = por %p81, %p82
      %p84 = scmp.ne.s32.totalorder %s75, %s76
      %p85 = scmp.eq.s32.totalorder %s23, 0
      %p86 = por %p84, %p85
      %p87 = scmp.ne.s32.totalorder %s75, %s76
      %p88 = scmp.eq.s32.totalorder %s24, 1
      %p89 = por %p87, %p88
      %p91 = scmp.ne.s32.totalorder %s76, %s90
      %p92 = scmp.eq.s32.totalorder %s24, 0
      %p93 = por %p91, %p92
      %s95 = sadd.s32 %s94, 1
      %p98 = scmp.eq.s32.totalorder %s18, 1
      %p99 = scmp.ne.s32.totalorder %s94, %s96
      %p100 = scmp.eq.s32.totalorder %s18, 0
      %p101 = por %p99, %p100
      %p102 = scmp.ne.s32.totalorder %s94, %s96
      %p103 = scmp.eq.s32.totalorder %s23, 1
      %p104 = por %p102, %p103
      %p105 = scmp.ne.s32.totalorder %s96, %s97
      %p106 = scmp.eq.s32.totalorder %s23, 0
      %p107 = por %p105, %p106
      %p108 = scmp.ne.s32.totalorder %s96, %s97
      %p109 = scmp.eq.s32.totalorder %s24, 1
      %p110 = por %p108, %p109
      %p112 = scmp.ne.s32.totalorder %s97, %s111
      %p113 = scmp.eq.s32.totalorder %s24, 0
      %p114 = por %p112, %p113
      %s116 = sadd.s32 %s115, 1
      %p119 = scmp.eq.s32.totalorder %s18, 1
      %p120 = scmp.ne.s32.totalorder %s115, %s117
      %p121 = scmp.eq.s32.totalorder %s18, 0
      %p122 = por %p120, %p121
      %p123 = scmp.ne.s32.totalorder %s115, %s117
      %p124 = scmp.eq.s32.totalorder %s23, 1
      %p125 = por %p123, %p124
      %p126 = scmp.ne.s32.totalorder %s117, %s118
      %p127 = scmp.eq.s32.totalorder %s23, 0
      %p128 = por %p126, %p127
      %p129 = scmp.ne.s32.totalorder %s117, %s118
      %p130 = scmp.eq.s32.totalorder %s24, 1
      %p131 = por %p129, %p130
      %p133 = scmp.ne.s32.totalorder %s118, %s132
      %p134 = scmp.eq.s32.totalorder %s24, 0
      %p135 = por %p133, %p134
      %s137 = sadd.s32 %s136, 1
      %p140 = scmp.eq.s32.totalorder %s18, 1
      %p141 = scmp.ne.s32.totalorder %s136, %s138
      %p142 = scmp.eq.s32.totalorder %s18, 0
      %p143 = por %p141, %p142
      %p144 = scmp.ne.s32.totalorder %s136, %s138
      %p145 = scmp.eq.s32.totalorder %s23, 1
      %p146 = por %p144, %p145
      %p147 = scmp.ne.s32.totalorder %s138, %s139
      %p148 = scmp.eq.s32.totalorder %s23, 0
      %p149 = por %p147, %p148
      %p150 = scmp.ne.s32.totalorder %s138, %s139
      %p151 = scmp.eq.s32.totalorder %s24, 1
      %p152 = por %p150, %p151
      %p154 = scmp.ne.s32.totalorder %s139, %s153
      %p155 = scmp.eq.s32.totalorder %s24, 0
      %p156 = por %p154, %p155
      %s158 = sadd.s32 %s157, 1
      %p161 = scmp.eq.s32.totalorder %s18, 1
      %p162 = scmp.ne.s32.totalorder %s157, %s159
      %p163 = scmp.eq.s32.totalorder %s18, 0
      %p164 = por %p162, %p163
      %p165 = scmp.ne.s32.totalorder %s157, %s159
      %p166 = scmp.eq.s32.totalorder %s23, 1
      %p167 = por %p165, %p166
      %p168 = scmp.ne.s32.totalorder %s159, %s160
      %p169 = scmp.eq.s32.totalorder %s23, 0
      %p170 = por %p168, %p169
      %p171 = scmp.ne.s32.totalorder %s159, %s160
      %p172 = scmp.eq.s32.totalorder %s24, 1
      %p173 = por %p171, %p172
      %p175 = scmp.ne.s32.totalorder %s160, %s174
      %p176 = scmp.eq.s32.totalorder %s24, 0
      %p177 = por %p175, %p176
      %s179 = sadd.s32 %s178, 1
      %p182 = scmp.eq.s32.totalorder %s18, 1
      %p183 = scmp.ne.s32.totalorder %s178, %s180
      %p184 = scmp.eq.s32.totalorder %s18, 0
      %p185 = por %p183, %p184
      %p186 = scmp.ne.s32.totalorder %s178, %s180
      %p187 = scmp.eq.s32.totalorder %s23, 1
      %p188 = por %p186, %p187
      %p189 = scmp.ne.s32.totalorder %s180, %s181
      %p190 = scmp.eq.s32.totalorder %s23, 0
      %p191 = por %p189, %p190
      %p192 = scmp.ne.s32.totalorder %s180, %s181
      %p193 = scmp.eq.s32.totalorder %s24, 1
      %p194 = por %p192, %p193
      %p196 = scmp.ne.s32.totalorder %s181, %s195
      %p197 = scmp.eq.s32.totalorder %s24, 0
      %p198 = por %p196, %p197
      %s199 = ssub.s32 %s18, %s25
      %p200 = scmp.eq.s32.totalorder %s199, 0
      %s202 = sadd.s32 %s201, 1
      %s203 = scalar_select %p200, %s201, %s202
      %p206 = pneg %p200
      %p207 = scmp.eq.s32.totalorder %s18, 1
      %p208 = por %p206, %p207
      %p209 = scmp.ne.s32.totalorder %s201, %s204
      %p210 = scmp.eq.s32.totalorder %s18, 0
      %p211 = por %p209, %p210
      %p212 = scmp.ne.s32.totalorder %s201, %s204
      %p213 = scmp.eq.s32.totalorder %s23, 1
      %p214 = por %p212, %p213
      %p215 = scmp.ne.s32.totalorder %s204, %s205
      %p216 = scmp.eq.s32.totalorder %s23, 0
      %p217 = por %p215, %p216
      %p218 = scmp.ne.s32.totalorder %s204, %s205
      %p219 = scmp.eq.s32.totalorder %s24, 1
      %p220 = por %p218, %p219
      %p222 = scmp.ne.s32.totalorder %s205, %s221
      %p223 = scmp.eq.s32.totalorder %s24, 0
      %p224 = por %p222, %p223
      %p225 = scmp.le.s32.totalorder 1, %s18
      %p226 = scmp.lt.s32.totalorder %s18, 3
      %p227 = pnand %p225, %p226
      %p228 = pneg %p227
      // Predicated region
      $region9: #{gpt_forward.1} parent=5 // pred_check
        _
      $region10: #{gpt_forward.1} parent=5 // pred_check_branch
        %230 = sbr.rel (%p227) target = $region12
      $region11: #{gpt_forward.1} parent=5 // pred_region
        %s231 = ssub.s32 %s18, 1
        // Predicated region
        $region13: #{gpt_forward.1} parent=11 // pred_check
          %p232 = pneg %p65
        $region14: #{gpt_forward.1} parent=11 // pred_check_branch
          %234 = sbr.rel (%p232) target = $region16
        $region15: #{gpt_forward.1} parent=11 // pred_region
          %s236 = ssub.s32 12288, 12288
          %237 = vsyncadd [#allocation3], %s236
          %s238 = sshll.u32 [#allocation2], 4
          %s239 = int_to_ptr.vmem [resolvable:$true] %s238
          %244 = dma.hbm_to_vmem [thread:$0]  %s1, 12288, %s239, [#allocation3], 384, 384, 24
        $region16: #{gpt_forward.1} parent=11 // pred_fallthru
          _
        // Predicated region
        $region17: #{gpt_forward.1} parent=11 // pred_check
          %p245 = pneg %p86
        $region18: #{gpt_forward.1} parent=11 // pred_check_branch
          %247 = sbr.rel (%p245) target = $region20
        $region19: #{gpt_forward.1} parent=11 // pred_region
          _
        $region20: #{gpt_forward.1} parent=11 // pred_fallthru
          _
        // Predicated region
        $region21: #{gpt_forward.1} parent=11 // pred_check
          %p248 = pneg %p107
        $region22: #{gpt_forward.1} parent=11 // pred_check_branch
          %250 = sbr.rel (%p248) target = $region24
        $region23: #{gpt_forward.1} parent=11 // pred_region
          _
        $region24: #{gpt_forward.1} parent=11 // pred_fallthru
          _
        // Predicated region
        $region25: #{gpt_forward.1} parent=11 // pred_check
          %p251 = pneg %p128
        $region26: #{gpt_forward.1} parent=11 // pred_check_branch
          %253 = sbr.rel (%p251) target = $region28
        $region27: #{gpt_forward.1} parent=11 // pred_region
          _
        $region28: #{gpt_forward.1} parent=11 // pred_fallthru
          _
        // Predicated region
        $region29: #{gpt_forward.1} parent=11 // pred_check
          %p254 = pneg %p149
        $region30: #{gpt_forward.1} parent=11 // pred_check_branch
          %256 = sbr.rel (%p254) target = $region32
        $region31: #{gpt_forward.1} parent=11 // pred_region
          _
        $region32: #{gpt_forward.1} parent=11 // pred_fallthru
          _
        // Predicated region
        $region33: #{gpt_forward.1} parent=11 // pred_check
          %p257 = pneg %p170
        $region34: #{gpt_forward.1} parent=11 // pred_check_branch
          %259 = sbr.rel (%p257) target = $region36
        $region35: #{gpt_forward.1} parent=11 // pred_region
          _
        $region36: #{gpt_forward.1} parent=11 // pred_fallthru
          _
        // Predicated region
        $region37: #{gpt_forward.1} parent=11 // pred_check
          %p260 = pneg %p191
        $region38: #{gpt_forward.1} parent=11 // pred_check_branch
          %262 = sbr.rel (%p260) target = $region40
        $region39: #{gpt_forward.1} parent=11 // pred_region
          _
        $region40: #{gpt_forward.1} parent=11 // pred_fallthru
          _
      $region12: #{gpt_forward.1} parent=5 // pred_fallthru
        _
      %p263 = scmp.lt.s32.totalorder %s18, 2
      // Predicated region
      $region41: #{gpt_forward.1} parent=5 // pred_check
        %p264 = pneg %p263
      $region42: #{gpt_forward.1} parent=5 // pred_check_branch
        %266 = sbr.rel (%p264) target = $region44
      $region43: #{gpt_forward.1} parent=5 // pred_region
        // Predicated region
        $region45: #{gpt_forward.1} parent=43 // pred_check
          %p267 = pneg %p38
        $region46: #{gpt_forward.1} parent=43 // pred_check_branch
          %269 = sbr.rel (%p267) target = $region48
        $region47: #{gpt_forward.1} parent=43 // pred_region
          %p270 = scmp.lt.s32.totalorder %s18, 1
          %s271 = scalar_select %p270, %s18, 1
          %s272 = smul.addr %s271, 8
          %s273 = scalar_lea.vmem %s0, %s272
        $region48: #{gpt_forward.1} parent=43 // pred_fallthru
          _
      $region44: #{gpt_forward.1} parent=5 // pred_fallthru
        _
      %p274 = scmp.le.s32.totalorder 1, %s18
      %p275 = scmp.lt.s32.totalorder %s18, 3
      %p276 = pnand %p274, %p275
      %p277 = pneg %p276
      // Predicated region
      $region49: #{gpt_forward.1} parent=5 // pred_check
        _
      $region50: #{gpt_forward.1} parent=5 // pred_check_branch
        %279 = sbr.rel (%p276) target = $region52
      $region51: #{gpt_forward.1} parent=5 // pred_region
        %s280 = ssub.s32 %s18, 1
        // Predicated region
        $region53: #{gpt_forward.1} parent=51 // pred_check
          %p281 = pneg %p65
        $region54: #{gpt_forward.1} parent=51 // pred_check_branch
          %283 = sbr.rel (%p281) target = $region56
        $region55: #{gpt_forward.1} parent=51 // pred_region
          %284 = dma.done [#allocation3], 12288
        $region56: #{gpt_forward.1} parent=51 // pred_fallthru
          _
        %p285 = scmp.lt.s32.totalorder %s23, 1
        %s286 = scalar_select %p285, %s23, 1
        %s287 = smul.addr %s286, 8
        %s288 = scalar_lea.vmem %s0, %s287
        %p289 = pneg %p44
        %p290 = pneg %p41
        %p291 = pneg %p65
        %p292 = pneg %p62
        %p293 = pneg %p86
        %p294 = pneg %p83
        %p295 = pneg %p107
        %p296 = pneg %p104
        %p297 = pneg %p128
        %p298 = pneg %p125
        %p299 = pneg %p149
        %p300 = pneg %p146
        %p301 = pneg %p170
        %p302 = pneg %p167
        %p303 = pneg %p191
        %p304 = pneg %p188
        %p305 = pneg %p217
        %p306 = pneg %p214
        %s307 = sand.u32 %s204, 1
        %s308 = scalar_lea.sflag [#allocation4], %s307
        %s309 = sand.u32 %s204, 1
        %s310 = smul.addr %s309, 8
        %s311 = scalar_lea.vmem [#allocation5], %s310
        %p312 = scmp.lt.s32.totalorder %s23, 1
        %s313 = scalar_select %p312, %s23, 1
        %s314 = smul.addr %s313, 8
        %s315 = scalar_lea.vmem %s0, %s314
        %v317 = vld [vmem:[%s315] sm:$0xff]
        %v318 = vlaneseq
        %v319 = vand.u32 %v318, 127
        %vm320 = vcmp.lt.s32.totalorder %v319, 32
        %v321 = vsel %vm320, 1, 0
        %v322 = vcvt.s32.f32 %v321
        %v323 = vld [vmem:[%s5] sm:$0xff]
        %v324 = vld [vmem:[%s5 + $0x8] sm:$0xff]
        %v325 = vld [vmem:[%s5 + $0x10] sm:$0xff]
        %v326 = vld [vmem:[%s5 + $0x18] sm:$0xff]
        %v327 = vld [vmem:[%s6] sm:$0xff]
        %v328 = vld [vmem:[%s7] sm:$0xff]
        %v329 = vld [vmem:[%s7 + $0x8] sm:$0xff]
        %v330 = vld [vmem:[%s7 + $0x10] sm:$0xff]
        %v331 = vld [vmem:[%s7 + $0x18] sm:$0xff]
        %v332 = vld [vmem:[%s2] sm:$0xff]
        %333 = vadd.xlane.f32.xlu0 %v317
        %v334 = vpop.xlane.xlu0 %333
        %v335 = vmul.f32 %v334, 0.03125
        %v336 = vsub.f32 %v317, %v335
        %v337 = vmul.f32 %v336, %v322
        %v338 = vmul.f32 %v337, %v337
        %339 = vadd.xlane.f32.xlu0 %v338
        %v340 = vpop.xlane.xlu0 %339
        %v341 = vmul.f32 %v340, 0.03125
        %v342 = vadd.f32 %v341, 1e-05
        %v343 = vrsqrt.pop %v342
        %v344 = vmul.f32 %v337, %v343
        %v345 = vlaneseq
        %v346 = vshrl.u32 %v345, 7
        %v347 = vsub.s32 0, %v346
        %v348 = vrot.slane %v332, %v347
        %v349 = vmul.f32 %v344, %v348
        %v350 = vlaneseq
        %v351 = vshrl.u32 %v350, 7
        %v352 = vsub.s32 1, %v351
        %v353 = vrot.slane %v332, %v352
        %v354 = vadd.f32 %v349, %v353
        %v355 = vpack.c.bf16 %v354, %v354
        %v356 = vld [vmem:[#allocation2] sm:$0xff]
        %v357 = vld [vmem:[#allocation2 + $0x8] sm:$0xf]
        %v358 = vld [vmem:[#allocation2 + $0x18] sm:$0xff]
        %v359 = vld [vmem:[#allocation2 + $0x20] sm:$0xf]
        %v360 = vld [vmem:[#allocation2 + $0x30] sm:$0xff]
        %v361 = vld [vmem:[#allocation2 + $0x38] sm:$0xf]
        %v362 = vld [vmem:[#allocation2 + $0x48] sm:$0xff]
        %v363 = vld [vmem:[#allocation2 + $0x50] sm:$0xf]
        %v364 = vld [vmem:[#allocation2 + $0x60] sm:$0xff]
        %v365 = vld [vmem:[#allocation2 + $0x68] sm:$0xf]
        %v366 = vld [vmem:[#allocation2 + $0x78] sm:$0xff]
        %v367 = vld [vmem:[#allocation2 + $0x80] sm:$0xf]
        %v368 = vld [vmem:[#allocation2 + $0x90] sm:$0xff]
        %v369 = vld [vmem:[#allocation2 + $0x98] sm:$0xf]
        %v370 = vld [vmem:[#allocation2 + $0xa8] sm:$0xff]
        %v371 = vld [vmem:[#allocation2 + $0xb0] sm:$0xf]
        %v372 = vld [vmem:[#allocation2 + $0xc0] sm:$0xff]
        %v373 = vld [vmem:[#allocation2 + $0xc8] sm:$0xf]
        %v374 = vld [vmem:[#allocation2 + $0xd8] sm:$0xff]
        %v375 = vld [vmem:[#allocation2 + $0xe0] sm:$0xf]
        %v376 = vld [vmem:[#allocation2 + $0xf0] sm:$0xff]
        %v377 = vld [vmem:[#allocation2 + $0xf8] sm:$0xf]
        %v378 = vld [vmem:[#allocation2 + $0x108] sm:$0xff]
        %v379 = vld [vmem:[#allocation2 + $0x110] sm:$0xf]
        %v380 = vld [vmem:[#allocation2 + $0x120] sm:$0xff]
        %v381 = vld [vmem:[#allocation2 + $0x128] sm:$0xf]
        %v382 = vld [vmem:[#allocation2 + $0x138] sm:$0xff]
        %v383 = vld [vmem:[#allocation2 + $0x140] sm:$0xf]
        %v384 = vld [vmem:[#allocation2 + $0x150] sm:$0xff]
        %v385 = vld [vmem:[#allocation2 + $0x158] sm:$0xf]
        %v386 = vld [vmem:[#allocation2 + $0x168] sm:$0xff]
        %v387 = vld [vmem:[#allocation2 + $0x170] sm:$0xf]
        %v420 = vunpack.c.l.b16 %v356
        %v421 = vunpack.c.h.b16 %v356
        %v422 = vunpack.c.l.b16 %v357
        %v423 = vunpack.c.l.b16 %v358
        %v424 = vunpack.c.h.b16 %v358
        %v425 = vunpack.c.l.b16 %v359
        %v426 = vunpack.c.l.b16 %v360
        %v427 = vunpack.c.h.b16 %v360
        %v428 = vunpack.c.l.b16 %v361
        %v429 = vunpack.c.l.b16 %v362
        %v430 = vunpack.c.h.b16 %v362
        %v431 = vunpack.c.l.b16 %v363
        %v432 = vunpack.c.l.b16 %v364
        %v433 = vunpack.c.h.b16 %v364
        %v434 = vunpack.c.l.b16 %v365
        %v435 = vunpack.c.l.b16 %v366
        %v436 = vunpack.c.h.b16 %v366
        %v437 = vunpack.c.l.b16 %v367
        %v438 = vunpack.c.l.b16 %v368
        %v439 = vunpack.c.h.b16 %v368
        %v440 = vunpack.c.l.b16 %v369
        %v441 = vunpack.c.l.b16 %v370
        %v442 = vunpack.c.h.b16 %v370
        %v443 = vunpack.c.l.b16 %v371
        %v444 = vunpack.c.l.b16 %v372
        %v445 = vunpack.c.h.b16 %v372
        %v446 = vunpack.c.l.b16 %v373
        %v447 = vunpack.c.l.b16 %v374
        %v448 = vunpack.c.h.b16 %v374
        %v449 = vunpack.c.l.b16 %v375
        %v450 = vunpack.c.l.b16 %v376
        %v451 = vunpack.c.h.b16 %v376
        %v452 = vunpack.c.l.b16 %v377
        %v453 = vunpack.c.l.b16 %v378
        %v454 = vunpack.c.h.b16 %v378
        %v455 = vunpack.c.l.b16 %v379
        %v456 = vunpack.c.l.b16 %v380
        %v457 = vunpack.c.h.b16 %v380
        %v458 = vunpack.c.l.b16 %v381
        %v459 = vunpack.c.l.b16 %v382
        %v460 = vunpack.c.h.b16 %v382
        %v461 = vunpack.c.l.b16 %v383
        %v462 = vunpack.c.l.b16 %v384
        %v463 = vunpack.c.h.b16 %v384
        %v464 = vunpack.c.l.b16 %v385
        %v465 = vunpack.c.l.b16 %v386
        %v466 = vunpack.c.h.b16 %v386
        %v467 = vunpack.c.l.b16 %v387
        %v468 = vpack.c.b16 %v423, %v420
        %v469 = vpack.c.b16 %v424, %v421
        %v470 = vpack.c.b16 %v425, %v422
        %v471 = vpack.c.b16 %v429, %v426
        %v472 = vpack.c.b16 %v430, %v427
        %v473 = vpack.c.b16 %v431, %v428
        %v474 = vpack.c.b16 %v435, %v432
        %v475 = vpack.c.b16 %v436, %v433
        %v476 = vpack.c.b16 %v437, %v434
        %v477 = vpack.c.b16 %v441, %v438
        %v478 = vpack.c.b16 %v442, %v439
        %v479 = vpack.c.b16 %v443, %v440
        %v480 = vpack.c.b16 %v447, %v444
        %v481 = vpack.c.b16 %v448, %v445
        %v482 = vpack.c.b16 %v449, %v446
        %v483 = vpack.c.b16 %v453, %v450
        %v484 = vpack.c.b16 %v454, %v451
        %v485 = vpack.c.b16 %v455, %v452
        %v486 = vpack.c.b16 %v459, %v456
        %v487 = vpack.c.b16 %v460, %v457
        %v488 = vpack.c.b16 %v461, %v458
        %v489 = vpack.c.b16 %v465, %v462
        %v490 = vpack.c.b16 %v466, %v463
        %v491 = vpack.c.b16 %v467, %v464
        %516 = vmatprep.subr.bf16.mxu0 %v490
        %517 = vmatpush1.bf16.msra.mxu0 %v489
        %518 = vmatprep.subr.bf16.mxu0 %v487
        %519 = vmatpush1.bf16.msra.mxu0 %v486
        %520 = vmatprep.subr.bf16.mxu0 %v484
        %521 = vmatpush1.bf16.msra.mxu0 %v483
        %522 = vmatprep.subr.bf16.mxu0 %v481
        %523 = vmatpush1.bf16.msra.mxu0 %v480
        %524 = vmatprep.subr.bf16.mxu0 %v478
        %525 = vmatpush1.bf16.msra.mxu0 %v477
        %526 = vmatprep.subr.bf16.mxu0 %v475
        %527 = vmatpush1.bf16.msra.mxu0 %v474
        %528 = vmatprep.subr.bf16.mxu0 %v472
        %529 = vmatpush1.bf16.msra.mxu0 %v471
        %530 = vmatprep.subr.bf16.mxu0 %v469
        %531 = vmatpush1.bf16.msra.mxu0 %v468
        %532 = vmatprep.subr.bf16.mxu0 0
        %533 = vmatpush2.bf16.msra.mxu0 0
        %534 = vmatprep.subr.bf16.mxu0 0
        %535 = vmatpush2.bf16.msra.mxu0 0
        %536 = vmatprep.subr.bf16.mxu0 0
        %537 = vmatpush2.bf16.msra.mxu0 0
        %538 = vmatprep.subr.bf16.mxu0 0
        %539 = vmatpush2.bf16.msra.mxu0 0
        %540 = vmatprep.subr.bf16.mxu0 0
        %541 = vmatpush2.bf16.msra.mxu0 0
        %542 = vmatprep.subr.bf16.mxu0 0
        %543 = vmatpush2.bf16.msra.mxu0 0
        %544 = vmatprep.subr.bf16.mxu0 0
        %545 = vmatpush2.bf16.msra.mxu0 0
        %546 = vmatprep.subr.bf16.mxu0 0
        %547 = vmatpush2.bf16.msra.mxu0 0
        %548 = vmatprep.mubr.bf16.mxu0 0
        %549 = vmatmul.mubr.bf16.gmra.mxu0 %v355
        %v550 = vpop.f32.mrf.mxu0
        %v551 = vadd.f32 0.0, %v550
        %v552 = vpop.f32.mrf.mxu0
        %v553 = vadd.f32 0.0, %v552
        %v554 = vpop.f32.mrf.mxu0
        %v555 = vpop.f32.mrf.mxu0
        %556 = vdwg.mxu0
        %557 = vmatprep.subr.bf16.mxu0 0
        %558 = vmatpush1.bf16.msra.mxu0 %v491
        %559 = vmatprep.subr.bf16.mxu0 0
        %560 = vmatpush1.bf16.msra.mxu0 %v488
        %561 = vmatprep.subr.bf16.mxu0 0
        %562 = vmatpush1.bf16.msra.mxu0 %v485
        %563 = vmatprep.subr.bf16.mxu0 0
        %564 = vmatpush1.bf16.msra.mxu0 %v482
        %565 = vmatprep.subr.bf16.mxu0 0
        %566 = vmatpush1.bf16.msra.mxu0 %v479
        %567 = vmatprep.subr.bf16.mxu0 0
        %568 = vmatpush1.bf16.msra.mxu0 %v476
        %569 = vmatprep.subr.bf16.mxu0 0
        %570 = vmatpush1.bf16.msra.mxu0 %v473
        %571 = vmatprep.subr.bf16.mxu0 0
        %572 = vmatpush1.bf16.msra.mxu0 %v470
        %573 = vmatprep.subr.bf16.mxu0 0
        %574 = vmatpush2.bf16.msra.mxu0 0
        %575 = vmatprep.subr.bf16.mxu0 0
        %576 = vmatpush2.bf16.msra.mxu0 0
        %577 = vmatprep.subr.bf16.mxu0 0
        %578 = vmatpush2.bf16.msra.mxu0 0
        %579 = vmatprep.subr.bf16.mxu0 0
        %580 = vmatpush2.bf16.msra.mxu0 0
        %581 = vmatprep.subr.bf16.mxu0 0
        %582 = vmatpush2.bf16.msra.mxu0 0
        %583 = vmatprep.subr.bf16.mxu0 0
        %584 = vmatpush2.bf16.msra.mxu0 0
        %585 = vmatprep.subr.bf16.mxu0 0
        %586 = vmatpush2.bf16.msra.mxu0 0
        %587 = vmatprep.subr.bf16.mxu0 0
        %588 = vmatpush2.bf16.msra.mxu0 0
        %589 = vmatprep.mubr.bf16.mxu0 0
        %590 = vmatmul.mubr.bf16.gmra.mxu0 %v355
        %v591 = vpop.f32.mrf.mxu0
        %v592 = vadd.f32 0.0, %v591
        %v593 = vpop.f32.mrf.mxu0
        %v594 = vpop.f32.mrf.mxu0
        %v595 = vpop.f32.mrf.mxu0
        %596 = vdwg.mxu0
        %v597 = vmul.f32 %v553, %v323
        %v598 = vmul.f32 %v553, %v324
        %v599 = vmul.f32 %v553, %v325
        %v600 = vmul.f32 %v553, %v326
        %v601 = vmul.f32 %v592, %v323
        %v602 = vmul.f32 %v592, %v324
        %v603 = vmul.f32 %v592, %v325
        %v604 = vmul.f32 %v592, %v326
        %vm605 = vcmask 261120
        %v607 = vsel %vm605, %v551, 0
        %v610 = vsel %vm605, %v597, 0
        %v613 = vsel %vm605, %v598, 0
        %v616 = vsel %vm605, %v599, 0
        %v619 = vsel %vm605, %v600, 0
        %621 = vmatprep.subr.mxu0 0.0
        %622 = vmatpush1.xpose.msra.mxu0 0.0
        %623 = vmatprep.subr.mxu0 0.0
        %624 = vmatpush1.xpose.msra.mxu0 0.0
        %625 = vmatprep.subr.mxu0 0.0
        %626 = vmatpush1.xpose.msra.mxu0 0.0
        %627 = vmatprep.subr.mxu0 0.0
        %628 = vmatpush1.xpose.msra.mxu0 0.0
        %629 = vmatprep.subr.mxu0 0.0
        %630 = vmatpush1.xpose.msra.mxu0 0.0
        %631 = vmatprep.subr.mxu0 0.0
        %632 = vmatpush1.xpose.msra.mxu0 0.0
        %633 = vmatprep.subr.mxu0 0.0
        %634 = vmatpush1.xpose.msra.mxu0 0.0
        %635 = vmatprep.subr.mxu0 0.0
        %636 = vmatpush1.xpose.msra.mxu0 0.0
        %637 = vmatprep.subr.mxu0 0.0
        %638 = vmatpush1.xpose.msra.mxu0 0.0
        %639 = vmatprep.subr.mxu0 0.0
        %640 = vmatpush1.xpose.msra.mxu0 0.0
        %641 = vmatprep.subr.mxu0 0.0
        %642 = vmatpush1.xpose.msra.mxu0 0.0
        %643 = vmatprep.subr.mxu0 0.0
        %644 = vmatpush1.xpose.msra.mxu0 0.0
        %645 = vmatprep.subr.mxu0 0.0
        %646 = vmatpush1.xpose.msra.mxu0 %v619
        %647 = vmatprep.subr.mxu0 0.0
        %648 = vmatpush1.xpose.msra.mxu0 %v616
        %649 = vmatprep.subr.mxu0 0.0
        %650 = vmatpush1.xpose.msra.mxu0 %v613
        %651 = vmatprep.subr.mxu0 0.0
        %652 = vmatpush1.xpose.msra.mxu0 %v610
        %653 = vmatprep.subr.mxu0 0.0
        %654 = vmatpush2.xpose.msra.mxu0 0.0
        %655 = vmatprep.subr.mxu0 0.0
        %656 = vmatpush2.xpose.msra.mxu0 0.0
        %657 = vmatprep.subr.mxu0 0.0
        %658 = vmatpush2.xpose.msra.mxu0 0.0
        %659 = vmatprep.subr.mxu0 0.0
        %660 = vmatpush2.xpose.msra.mxu0 0.0
        %661 = vmatprep.subr.mxu0 0.0
        %662 = vmatpush2.xpose.msra.mxu0 0.0
        %663 = vmatprep.subr.mxu0 0.0
        %664 = vmatpush2.xpose.msra.mxu0 0.0
        %665 = vmatprep.subr.mxu0 0.0
        %666 = vmatpush2.xpose.msra.mxu0 0.0
        %667 = vmatprep.subr.mxu0 0.0
        %668 = vmatpush2.xpose.msra.mxu0 0.0
        %669 = vmatprep.subr.mxu0 0.0
        %670 = vmatpush2.xpose.msra.mxu0 0.0
        %671 = vmatprep.subr.mxu0 0.0
        %672 = vmatpush2.xpose.msra.mxu0 0.0
        %673 = vmatprep.subr.mxu0 0.0
        %674 = vmatpush2.xpose.msra.mxu0 0.0
        %675 = vmatprep.subr.mxu0 0.0
        %676 = vmatpush2.xpose.msra.mxu0 0.0
        %677 = vmatprep.subr.mxu0 0.0
        %678 = vmatpush2.xpose.msra.mxu0 0.0
        %679 = vmatprep.subr.mxu0 0.0
        %680 = vmatpush2.xpose.msra.mxu0 0.0
        %681 = vmatprep.subr.mxu0 0.0
        %682 = vmatpush2.xpose.msra.mxu0 0.0
        %683 = vmatprep.subr.mxu0 0.0
        %684 = vmatpush2.xpose.msra.mxu0 0.0
        %685 = vmatprep.mubr.f32.mxu0 0.0
        %686 = vmatmul.mubr.f32.gmra.mxu0 %v607
        %v687 = vpop.f32.mrf.mxu0
        %v688 = vadd.f32 0.0, %v687
        %v689 = vpop.f32.mrf.mxu0
        %690 = vdwg.mxu0
        %v691 = vmul.f32 %v688, 0.35355338
        %v692 = vadd.f32 %v691, %v327
        %v693 = vsel %vm605, %v692, -inf
        %694 = vmax.xlane.f32.xlu0 %v693
        %v695 = vpop.xlane.xlu0 %694
        %v696 = vsub.f32 %v692, %v695
        %v697 = vmul.f32 %v696, 1.442695
        %v698 = vpow.pop %v697
        %v700 = vsel %vm605, %v698, 0
        %702 = vmatprep.subr.mxu0 0.0
        %703 = vmatpush1.msra.mxu0 0.0
        %704 = vmatprep.subr.mxu0 0.0
        %705 = vmatpush1.msra.mxu0 0.0
        %706 = vmatprep.subr.mxu0 0.0
        %707 = vmatpush1.msra.mxu0 0.0
        %708 = vmatprep.subr.mxu0 0.0
        %709 = vmatpush1.msra.mxu0 0.0
        %710 = vmatprep.subr.mxu0 0.0
        %711 = vmatpush1.msra.mxu0 0.0
        %712 = vmatprep.subr.mxu0 0.0
        %713 = vmatpush1.msra.mxu0 0.0
        %714 = vmatprep.subr.mxu0 0.0
        %715 = vmatpush1.msra.mxu0 0.0
        %716 = vmatprep.subr.mxu0 0.0
        %717 = vmatpush1.msra.mxu0 0.0
        %718 = vmatprep.subr.mxu0 0.0
        %719 = vmatpush1.msra.mxu0 0.0
        %720 = vmatprep.subr.mxu0 0.0
        %721 = vmatpush1.msra.mxu0 0.0
        %722 = vmatprep.subr.mxu0 0.0
        %723 = vmatpush1.msra.mxu0 0.0
        %724 = vmatprep.subr.mxu0 0.0
        %725 = vmatpush1.msra.mxu0 0.0
        %726 = vmatprep.subr.mxu0 0.0
        %727 = vmatpush1.msra.mxu0 %v331
        %728 = vmatprep.subr.mxu0 0.0
        %729 = vmatpush1.msra.mxu0 %v330
        %730 = vmatprep.subr.mxu0 0.0
        %731 = vmatpush1.msra.mxu0 %v329
        %732 = vmatprep.subr.mxu0 0.0
        %733 = vmatpush1.msra.mxu0 %v328
        %734 = vmatprep.subr.mxu0 0.0
        %735 = vmatpush2.msra.mxu0 0.0
        %736 = vmatprep.subr.mxu0 0.0
        %737 = vmatpush2.msra.mxu0 0.0
        %738 = vmatprep.subr.mxu0 0.0
        %739 = vmatpush2.msra.mxu0 0.0
        %740 = vmatprep.subr.mxu0 0.0
        %741 = vmatpush2.msra.mxu0 0.0
        %742 = vmatprep.subr.mxu0 0.0
        %743 = vmatpush2.msra.mxu0 0.0
        %744 = vmatprep.subr.mxu0 0.0
        %745 = vmatpush2.msra.mxu0 0.0
        %746 = vmatprep.subr.mxu0 0.0
        %747 = vmatpush2.msra.mxu0 0.0
        %748 = vmatprep.subr.mxu0 0.0
        %749 = vmatpush2.msra.mxu0 0.0
        %750 = vmatprep.subr.mxu0 0.0
        %751 = vmatpush2.msra.mxu0 0.0
        %752 = vmatprep.subr.mxu0 0.0
        %753 = vmatpush2.msra.mxu0 0.0
        %754 = vmatprep.subr.mxu0 0.0
        %755 = vmatpush2.msra.mxu0 0.0
        %756 = vmatprep.subr.mxu0 0.0
        %757 = vmatpush2.msra.mxu0 0.0
        %758 = vmatprep.subr.mxu0 0.0
        %759 = vmatpush2.msra.mxu0 0.0
        %760 = vmatprep.subr.mxu0 0.0
        %761 = vmatpush2.msra.mxu0 0.0
        %762 = vmatprep.subr.mxu0 0.0
        %763 = vmatpush2.msra.mxu0 0.0
        %764 = vmatprep.subr.mxu0 0.0
        %765 = vmatpush2.msra.mxu0 0.0
        %766 = vmatprep.mubr.f32.mxu0 0.0
        %767 = vmatmul.mubr.f32.gmra.mxu0 %v700
        %v768 = vpop.f32.mrf.mxu0
        %v769 = vadd.f32 0.0, %v768
        %v770 = vpop.f32.mrf.mxu0
        %771 = vdwg.mxu0
        %v772 = vrcp.pop %v769
        %v773 = vmul.f32 %v698, %v772
        %v775 = vsel %vm605, %v773, 0
        %777 = vmatprep.subr.mxu0 0.0
        %778 = vmatpush1.msra.mxu0 0.0
        %779 = vmatprep.subr.mxu0 0.0
        %780 = vmatpush1.msra.mxu0 0.0
        %781 = vmatprep.subr.mxu0 0.0
        %782 = vmatpush1.msra.mxu0 0.0
        %783 = vmatprep.subr.mxu0 0.0
        %784 = vmatpush1.msra.mxu0 0.0
        %785 = vmatprep.subr.mxu0 0.0
        %786 = vmatpush1.msra.mxu0 0.0
        %787 = vmatprep.subr.mxu0 0.0
        %788 = vmatpush1.msra.mxu0 0.0
        %789 = vmatprep.subr.mxu0 0.0
        %790 = vmatpush1.msra.mxu0 0.0
        %791 = vmatprep.subr.mxu0 0.0
        %792 = vmatpush1.msra.mxu0 0.0
        %793 = vmatprep.subr.mxu0 0.0
        %794 = vmatpush1.msra.mxu0 0.0
        %795 = vmatprep.subr.mxu0 0.0
        %796 = vmatpush1.msra.mxu0 0.0
        %797 = vmatprep.subr.mxu0 0.0
        %798 = vmatpush1.msra.mxu0 0.0
        %799 = vmatprep.subr.mxu0 0.0
        %800 = vmatpush1.msra.mxu0 0.0
        %801 = vmatprep.subr.mxu0 0.0
        %802 = vmatpush1.msra.mxu0 %v604
        %803 = vmatprep.subr.mxu0 0.0
        %804 = vmatpush1.msra.mxu0 %v603
        %805 = vmatprep.subr.mxu0 0.0
        %806 = vmatpush1.msra.mxu0 %v602
        %807 = vmatprep.subr.mxu0 0.0
        %808 = vmatpush1.msra.mxu0 %v601
        %809 = vmatprep.subr.mxu0 0.0
        %810 = vmatpush2.msra.mxu0 0.0
        %811 = vmatprep.subr.mxu0 0.0
        %812 = vmatpush2.msra.mxu0 0.0
        %813 = vmatprep.subr.mxu0 0.0
        %814 = vmatpush2.msra.mxu0 0.0
        %815 = vmatprep.subr.mxu0 0.0
        %816 = vmatpush2.msra.mxu0 0.0
        %817 = vmatprep.subr.mxu0 0.0
        %818 = vmatpush2.msra.mxu0 0.0
        %819 = vmatprep.subr.mxu0 0.0
        %820 = vmatpush2.msra.mxu0 0.0
        %821 = vmatprep.subr.mxu0 0.0
        %822 = vmatpush2.msra.mxu0 0.0
        %823 = vmatprep.subr.mxu0 0.0
        %824 = vmatpush2.msra.mxu0 0.0
        %825 = vmatprep.subr.mxu0 0.0
        %826 = vmatpush2.msra.mxu0 0.0
        %827 = vmatprep.subr.mxu0 0.0
        %828 = vmatpush2.msra.mxu0 0.0
        %829 = vmatprep.subr.mxu0 0.0
        %830 = vmatpush2.msra.mxu0 0.0
        %831 = vmatprep.subr.mxu0 0.0
        %832 = vmatpush2.msra.mxu0 0.0
        %833 = vmatprep.subr.mxu0 0.0
        %834 = vmatpush2.msra.mxu0 0.0
        %835 = vmatprep.subr.mxu0 0.0
        %836 = vmatpush2.msra.mxu0 0.0
        %837 = vmatprep.subr.mxu0 0.0
        %838 = vmatpush2.msra.mxu0 0.0
        %839 = vmatprep.subr.mxu0 0.0
        %840 = vmatpush2.msra.mxu0 0.0
        %841 = vmatprep.mubr.f32.mxu0 0.0
        %842 = vmatmul.mubr.f32.gmra.mxu0 %v775
        %v843 = vpop.f32.mrf.mxu0
        %v844 = vadd.f32 0.0, %v843
        %v845 = vpop.f32.mrf.mxu0
        %846 = vdwg.mxu0
        %v847 = vpack.c.bf16 %v844, %v844
        %v848 = vld [vmem:[#allocation2 + $0xc] sm:$0xf]
        %v849 = vld [vmem:[#allocation2 + $0x24] sm:$0xf]
        %v850 = vld [vmem:[#allocation2 + $0x3c] sm:$0xf]
        %v851 = vld [vmem:[#allocation2 + $0x54] sm:$0xf]
        %v856 = vunpack.c.l.b16 %v848
        %v857 = vunpack.c.l.b16 %v849
        %v858 = vunpack.c.l.b16 %v850
        %v859 = vunpack.c.l.b16 %v851
        %v860 = vpack.c.b16 %v857, %v856
        %v861 = vpack.c.b16 %v859, %v858
        %v865 = vsel %vm605, %v847, 0
        %867 = vmatprep.subr.bf16.mxu0 0
        %868 = vmatpush1.bf16.msra.mxu0 0
        %869 = vmatprep.subr.bf16.mxu0 0
        %870 = vmatpush1.bf16.msra.mxu0 0
        %871 = vmatprep.subr.bf16.mxu0 0
        %872 = vmatpush1.bf16.msra.mxu0 0
        %873 = vmatprep.subr.bf16.mxu0 0
        %874 = vmatpush1.bf16.msra.mxu0 0
        %875 = vmatprep.subr.bf16.mxu0 0
        %876 = vmatpush1.bf16.msra.mxu0 0
        %877 = vmatprep.subr.bf16.mxu0 0
        %878 = vmatpush1.bf16.msra.mxu0 0
        %879 = vmatprep.subr.bf16.mxu0 0
        %880 = vmatpush1.bf16.msra.mxu0 %v861
        %881 = vmatprep.subr.bf16.mxu0 0
        %882 = vmatpush1.bf16.msra.mxu0 %v860
        %883 = vmatprep.subr.bf16.mxu0 0
        %884 = vmatpush2.bf16.msra.mxu0 0
        %885 = vmatprep.subr.bf16.mxu0 0
        %886 = vmatpush2.bf16.msra.mxu0 0
        %887 = vmatprep.subr.bf16.mxu0 0
        %888 = vmatpush2.bf16.msra.mxu0 0
        %889 = vmatprep.subr.bf16.mxu0 0
        %890 = vmatpush2.bf16.msra.mxu0 0
        %891 = vmatprep.subr.bf16.mxu0 0
        %892 = vmatpush2.bf16.msra.mxu0 0
        %893 = vmatprep.subr.bf16.mxu0 0
        %894 = vmatpush2.bf16.msra.mxu0 0
        %895 = vmatprep.subr.bf16.mxu0 0
        %896 = vmatpush2.bf16.msra.mxu0 0
        %897 = vmatprep.subr.bf16.mxu0 0
        %898 = vmatpush2.bf16.msra.mxu0 0
        %899 = vmatprep.mubr.bf16.mxu0 0
        %900 = vmatmul.mubr.bf16.gmra.mxu0 %v865
        %v901 = vpop.f32.mrf.mxu0
        %v902 = vadd.f32 0.0, %v901
        %v903 = vpop.f32.mrf.mxu0
        %v904 = vpop.f32.mrf.mxu0
        %v905 = vpop.f32.mrf.mxu0
        %906 = vdwg.mxu0
        %v907 = vadd.f32 %v317, %v902
        %v908 = vlaneseq
        %v909 = vshrl.u32 %v908, 7
        %v910 = vsub.s32 4, %v909
        %v911 = vrot.slane %v332, %v910
        %v912 = vadd.f32 %v907, %v911
        %913 = vadd.xlane.f32.xlu0 %v912
        %v914 = vpop.xlane.xlu0 %913
        %v915 = vmul.f32 %v914, 0.03125
        %v916 = vsub.f32 %v912, %v915
        %v917 = vmul.f32 %v916, %v322
        %v918 = vmul.f32 %v917, %v917
        %919 = vadd.xlane.f32.xlu0 %v918
        %v920 = vpop.xlane.xlu0 %919
        %v921 = vmul.f32 %v920, 0.03125
        %v922 = vadd.f32 %v921, 1e-05
        %v923 = vrsqrt.pop %v922
        %v924 = vmul.f32 %v917, %v923
        %v925 = vlaneseq
        %v926 = vshrl.u32 %v925, 7
        %v927 = vsub.s32 2, %v926
        %v928 = vrot.slane %v332, %v927
        %v929 = vmul.f32 %v924, %v928
        %v930 = vlaneseq
        %v931 = vshrl.u32 %v930, 7
        %v932 = vsub.s32 3, %v931
        %v933 = vrot.slane %v332, %v932
        %v934 = vadd.f32 %v929, %v933
        %v935 = vpack.c.bf16 %v934, %v934
        %v936 = vld [vmem:[#allocation2 + $0x10] sm:$0xf]
        %v937 = vld [vmem:[#allocation2 + $0x28] sm:$0xf]
        %v938 = vld [vmem:[#allocation2 + $0x40] sm:$0xf]
        %v939 = vld [vmem:[#allocation2 + $0x58] sm:$0xf]
        %v940 = vld [vmem:[#allocation2 + $0x70] sm:$0xf]
        %v941 = vld [vmem:[#allocation2 + $0x88] sm:$0xf]
        %v942 = vld [vmem:[#allocation2 + $0xa0] sm:$0xf]
        %v943 = vld [vmem:[#allocation2 + $0xb8] sm:$0xf]
        %v944 = vld [vmem:[#allocation2 + $0xd0] sm:$0xf]
        %v945 = vld [vmem:[#allocation2 + $0xe8] sm:$0xf]
        %v946 = vld [vmem:[#allocation2 + $0x100] sm:$0xf]
        %v947 = vld [vmem:[#allocation2 + $0x118] sm:$0xf]
        %v948 = vld [vmem:[#allocation2 + $0x130] sm:$0xf]
        %v949 = vld [vmem:[#allocation2 + $0x148] sm:$0xf]
        %v950 = vld [vmem:[#allocation2 + $0x160] sm:$0xf]
        %v951 = vld [vmem:[#allocation2 + $0x178] sm:$0xf]
        %v952 = vlaneseq
        %v953 = vshrl.u32 %v952, 7
        %v954 = vsub.s32 5, %v953
        %v955 = vrot.slane %v332, %v954
        %v972 = vunpack.c.l.b16 %v936
        %v973 = vunpack.c.l.b16 %v937
        %v974 = vunpack.c.l.b16 %v938
        %v975 = vunpack.c.l.b16 %v939
        %v976 = vunpack.c.l.b16 %v940
        %v977 = vunpack.c.l.b16 %v941
        %v978 = vunpack.c.l.b16 %v942
        %v979 = vunpack.c.l.b16 %v943
        %v980 = vunpack.c.l.b16 %v944
        %v981 = vunpack.c.l.b16 %v945
        %v982 = vunpack.c.l.b16 %v946
        %v983 = vunpack.c.l.b16 %v947
        %v984 = vunpack.c.l.b16 %v948
        %v985 = vunpack.c.l.b16 %v949
        %v986 = vunpack.c.l.b16 %v950
        %v987 = vunpack.c.l.b16 %v951
        %v988 = vpack.c.b16 %v973, %v972
        %v989 = vpack.c.b16 %v975, %v974
        %v990 = vpack.c.b16 %v977, %v976
        %v991 = vpack.c.b16 %v979, %v978
        %v992 = vpack.c.b16 %v981, %v980
        %v993 = vpack.c.b16 %v983, %v982
        %v994 = vpack.c.b16 %v985, %v984
        %v995 = vpack.c.b16 %v987, %v986
        %1004 = vmatprep.subr.bf16.mxu0 0
        %1005 = vmatpush1.bf16.msra.mxu0 %v995
        %1006 = vmatprep.subr.bf16.mxu0 0
        %1007 = vmatpush1.bf16.msra.mxu0 %v994
        %1008 = vmatprep.subr.bf16.mxu0 0
        %1009 = vmatpush1.bf16.msra.mxu0 %v993
        %1010 = vmatprep.subr.bf16.mxu0 0
        %1011 = vmatpush1.bf16.msra.mxu0 %v992
        %1012 = vmatprep.subr.bf16.mxu0 0
        %1013 = vmatpush1.bf16.msra.mxu0 %v991
        %1014 = vmatprep.subr.bf16.mxu0 0
        %1015 = vmatpush1.bf16.msra.mxu0 %v990
        %1016 = vmatprep.subr.bf16.mxu0 0
        %1017 = vmatpush1.bf16.msra.mxu0 %v989
        %1018 = vmatprep.subr.bf16.mxu0 0
        %1019 = vmatpush1.bf16.msra.mxu0 %v988
        %1020 = vmatprep.subr.bf16.mxu0 0
        %1021 = vmatpush2.bf16.msra.mxu0 0
        %1022 = vmatprep.subr.bf16.mxu0 0
        %1023 = vmatpush2.bf16.msra.mxu0 0
        %1024 = vmatprep.subr.bf16.mxu0 0
        %1025 = vmatpush2.bf16.msra.mxu0 0
        %1026 = vmatprep.subr.bf16.mxu0 0
        %1027 = vmatpush2.bf16.msra.mxu0 0
        %1028 = vmatprep.subr.bf16.mxu0 0
        %1029 = vmatpush2.bf16.msra.mxu0 0
        %1030 = vmatprep.subr.bf16.mxu0 0
        %1031 = vmatpush2.bf16.msra.mxu0 0
        %1032 = vmatprep.subr.bf16.mxu0 0
        %1033 = vmatpush2.bf16.msra.mxu0 0
        %1034 = vmatprep.subr.bf16.mxu0 0
        %1035 = vmatpush2.bf16.msra.mxu0 0
        %1036 = vmatprep.mubr.bf16.mxu0 0
        %1037 = vmatmul.mubr.bf16.gmra.mxu0 %v935
        %v1038 = vpop.f32.mrf.mxu0
        %v1039 = vadd.f32 %v955, %v1038
        %v1040 = vpop.f32.mrf.mxu0
        %v1041 = vpop.f32.mrf.mxu0
        %v1042 = vpop.f32.mrf.mxu0
        %1043 = vdwg.mxu0
        %v1044 = vmax.f32 %v1039, 0.0
        %v1045 = vpack.c.bf16 %v1044, %v1044
        %v1046 = vld [vmem:[#allocation2 + $0x14] sm:$0xf]
        %v1047 = vld [vmem:[#allocation2 + $0x2c] sm:$0xf]
        %v1048 = vld [vmem:[#allocation2 + $0x44] sm:$0xf]
        %v1049 = vld [vmem:[#allocation2 + $0x5c] sm:$0xf]
        %v1050 = vld [vmem:[#allocation2 + $0x74] sm:$0xf]
        %v1051 = vld [vmem:[#allocation2 + $0x8c] sm:$0xf]
        %v1052 = vld [vmem:[#allocation2 + $0xa4] sm:$0xf]
        %v1053 = vld [vmem:[#allocation2 + $0xbc] sm:$0xf]
        %v1054 = vld [vmem:[#allocation2 + $0xd4] sm:$0xf]
        %v1055 = vld [vmem:[#allocation2 + $0xec] sm:$0xf]
        %v1056 = vld [vmem:[#allocation2 + $0x104] sm:$0xf]
        %v1057 = vld [vmem:[#allocation2 + $0x11c] sm:$0xf]
        %v1058 = vld [vmem:[#allocation2 + $0x134] sm:$0xf]
        %v1059 = vld [vmem:[#allocation2 + $0x14c] sm:$0xf]
        %v1060 = vld [vmem:[#allocation2 + $0x164] sm:$0xf]
        %v1061 = vld [vmem:[#allocation2 + $0x17c] sm:$0xf]
        %v1062 = vlaneseq
        %v1063 = vshrl.u32 %v1062, 7
        %v1064 = vsub.s32 6, %v1063
        %v1065 = vrot.slane %v332, %v1064
        %v1082 = vunpack.c.l.b16 %v1046
        %v1083 = vunpack.c.l.b16 %v1047
        %v1084 = vunpack.c.l.b16 %v1048
        %v1085 = vunpack.c.l.b16 %v1049
        %v1086 = vunpack.c.l.b16 %v1050
        %v1087 = vunpack.c.l.b16 %v1051
        %v1088 = vunpack.c.l.b16 %v1052
        %v1089 = vunpack.c.l.b16 %v1053
        %v1090 = vunpack.c.l.b16 %v1054
        %v1091 = vunpack.c.l.b16 %v1055
        %v1092 = vunpack.c.l.b16 %v1056
        %v1093 = vunpack.c.l.b16 %v1057
        %v1094 = vunpack.c.l.b16 %v1058
        %v1095 = vunpack.c.l.b16 %v1059
        %v1096 = vunpack.c.l.b16 %v1060
        %v1097 = vunpack.c.l.b16 %v1061
        %v1098 = vpack.c.b16 %v1083, %v1082
        %v1099 = vpack.c.b16 %v1085, %v1084
        %v1100 = vpack.c.b16 %v1087, %v1086
        %v1101 = vpack.c.b16 %v1089, %v1088
        %v1102 = vpack.c.b16 %v1091, %v1090
        %v1103 = vpack.c.b16 %v1093, %v1092
        %v1104 = vpack.c.b16 %v1095, %v1094
        %v1105 = vpack.c.b16 %v1097, %v1096
        %1114 = vmatprep.subr.bf16.mxu0 0
        %1115 = vmatpush1.bf16.msra.mxu0 %v1105
        %1116 = vmatprep.subr.bf16.mxu0 0
        %1117 = vmatpush1.bf16.msra.mxu0 %v1104
        %1118 = vmatprep.subr.bf16.mxu0 0
        %1119 = vmatpush1.bf16.msra.mxu0 %v1103
        %1120 = vmatprep.subr.bf16.mxu0 0
        %1121 = vmatpush1.bf16.msra.mxu0 %v1102
        %1122 = vmatprep.subr.bf16.mxu0 0
        %1123 = vmatpush1.bf16.msra.mxu0 %v1101
        %1124 = vmatprep.subr.bf16.mxu0 0
        %1125 = vmatpush1.bf16.msra.mxu0 %v1100
        %1126 = vmatprep.subr.bf16.mxu0 0
        %1127 = vmatpush1.bf16.msra.mxu0 %v1099
        %1128 = vmatprep.subr.bf16.mxu0 0
        %1129 = vmatpush1.bf16.msra.mxu0 %v1098
        %1130 = vmatprep.subr.bf16.mxu0 0
        %1131 = vmatpush2.bf16.msra.mxu0 0
        %1132 = vmatprep.subr.bf16.mxu0 0
        %1133 = vmatpush2.bf16.msra.mxu0 0
        %1134 = vmatprep.subr.bf16.mxu0 0
        %1135 = vmatpush2.bf16.msra.mxu0 0
        %1136 = vmatprep.subr.bf16.mxu0 0
        %1137 = vmatpush2.bf16.msra.mxu0 0
        %1138 = vmatprep.subr.bf16.mxu0 0
        %1139 = vmatpush2.bf16.msra.mxu0 0
        %1140 = vmatprep.subr.bf16.mxu0 0
        %1141 = vmatpush2.bf16.msra.mxu0 0
        %1142 = vmatprep.subr.bf16.mxu0 0
        %1143 = vmatpush2.bf16.msra.mxu0 0
        %1144 = vmatprep.subr.bf16.mxu0 0
        %1145 = vmatpush2.bf16.msra.mxu0 0
        %1146 = vmatprep.mubr.bf16.mxu0 0
        %1147 = vmatmul.mubr.bf16.gmra.mxu0 %v1045
        %v1148 = vpop.f32.mrf.mxu0
        %v1149 = vadd.f32 %v1065, %v1148
        %v1150 = vpop.f32.mrf.mxu0
        %v1151 = vpop.f32.mrf.mxu0
        %v1152 = vpop.f32.mrf.mxu0
        %1153 = vdwg.mxu0
        %v1154 = vadd.f32 %v912, %v1149
        %s1155 = scalar_lea.vmem %s2, 8
        %v1156 = vld [vmem:[%s1155] sm:$0xff]
        %1157 = vadd.xlane.f32.xlu0 %v1154
        %v1158 = vpop.xlane.xlu0 %1157
        %v1159 = vmul.f32 %v1158, 0.03125
        %v1160 = vsub.f32 %v1154, %v1159
        %v1161 = vmul.f32 %v1160, %v322
        %v1162 = vmul.f32 %v1161, %v1161
        %1163 = vadd.xlane.f32.xlu0 %v1162
        %v1164 = vpop.xlane.xlu0 %1163
        %v1165 = vmul.f32 %v1164, 0.03125
        %v1166 = vadd.f32 %v1165, 1e-05
        %v1167 = vrsqrt.pop %v1166
        %v1168 = vmul.f32 %v1161, %v1167
        %v1169 = vlaneseq
        %v1170 = vshrl.u32 %v1169, 7
        %v1171 = vsub.s32 0, %v1170
        %v1172 = vrot.slane %v1156, %v1171
        %v1173 = vmul.f32 %v1168, %v1172
        %v1174 = vlaneseq
        %v1175 = vshrl.u32 %v1174, 7
        %v1176 = vsub.s32 1, %v1175
        %v1177 = vrot.slane %v1156, %v1176
        %v1178 = vadd.f32 %v1173, %v1177
        %v1179 = vpack.c.bf16 %v1178, %v1178
        %s1180 = scalar_lea.vmem [#allocation2], 384
        %v1181 = vld [vmem:[%s1180] sm:$0xff]
        %v1182 = vld [vmem:[%s1180 + $0x8] sm:$0xf]
        %v1183 = vld [vmem:[%s1180 + $0x18] sm:$0xff]
        %v1184 = vld [vmem:[%s1180 + $0x20] sm:$0xf]
        %v1185 = vld [vmem:[%s1180 + $0x30] sm:$0xff]
        %v1186 = vld [vmem:[%s1180 + $0x38] sm:$0xf]
        %v1187 = vld [vmem:[%s1180 + $0x48] sm:$0xff]
        %v1188 = vld [vmem:[%s1180 + $0x50] sm:$0xf]
        %v1189 = vld [vmem:[%s1180 + $0x60] sm:$0xff]
        %v1190 = vld [vmem:[%s1180 + $0x68] sm:$0xf]
        %v1191 = vld [vmem:[%s1180 + $0x78] sm:$0xff]
        %v1192 = vld [vmem:[%s1180 + $0x80] sm:$0xf]
        %v1193 = vld [vmem:[%s1180 + $0x90] sm:$0xff]
        %v1194 = vld [vmem:[%s1180 + $0x98] sm:$0xf]
        %v1195 = vld [vmem:[%s1180 + $0xa8] sm:$0xff]
        %v1196 = vld [vmem:[%s1180 + $0xb0] sm:$0xf]
        %v1197 = vld [vmem:[%s1180 + $0xc0] sm:$0xff]
        %v1198 = vld [vmem:[%s1180 + $0xc8] sm:$0xf]
        %v1199 = vld [vmem:[%s1180 + $0xd8] sm:$0xff]
        %v1200 = vld [vmem:[%s1180 + $0xe0] sm:$0xf]
        %v1201 = vld [vmem:[%s1180 + $0xf0] sm:$0xff]
        %v1202 = vld [vmem:[%s1180 + $0xf8] sm:$0xf]
        %v1203 = vld [vmem:[%s1180 + $0x108] sm:$0xff]
        %v1204 = vld [vmem:[%s1180 + $0x110] sm:$0xf]
        %v1205 = vld [vmem:[%s1180 + $0x120] sm:$0xff]
        %v1206 = vld [vmem:[%s1180 + $0x128] sm:$0xf]
        %v1207 = vld [vmem:[%s1180 + $0x138] sm:$0xff]
        %v1208 = vld [vmem:[%s1180 + $0x140] sm:$0xf]
        %v1209 = vld [vmem:[%s1180 + $0x150] sm:$0xff]
        %v1210 = vld [vmem:[%s1180 + $0x158] sm:$0xf]
        %v1211 = vld [vmem:[%s1180 + $0x168] sm:$0xff]
        %v1212 = vld [vmem:[%s1180 + $0x170] sm:$0xf]
        %v1245 = vunpack.c.l.b16 %v1181
        %v1246 = vunpack.c.h.b16 %v1181
        %v1247 = vunpack.c.l.b16 %v1182
        %v1248 = vunpack.c.l.b16 %v1183
        %v1249 = vunpack.c.h.b16 %v1183
        %v1250 = vunpack.c.l.b16 %v1184
        %v1251 = vunpack.c.l.b16 %v1185
        %v1252 = vunpack.c.h.b16 %v1185
        %v1253 = vunpack.c.l.b16 %v1186
        %v1254 = vunpack.c.l.b16 %v1187
        %v1255 = vunpack.c.h.b16 %v1187
        %v1256 = vunpack.c.l.b16 %v1188
        %v1257 = vunpack.c.l.b16 %v1189
        %v1258 = vunpack.c.h.b16 %v1189
        %v1259 = vunpack.c.l.b16 %v1190
        %v1260 = vunpack.c.l.b16 %v1191
        %v1261 = vunpack.c.h.b16 %v1191
        %v1262 = vunpack.c.l.b16 %v1192
        %v1263 = vunpack.c.l.b16 %v1193
        %v1264 = vunpack.c.h.b16 %v1193
        %v1265 = vunpack.c.l.b16 %v1194
        %v1266 = vunpack.c.l.b16 %v1195
        %v1267 = vunpack.c.h.b16 %v1195
        %v1268 = vunpack.c.l.b16 %v1196
        %v1269 = vunpack.c.l.b16 %v1197
        %v1270 = vunpack.c.h.b16 %v1197
        %v1271 = vunpack.c.l.b16 %v1198
        %v1272 = vunpack.c.l.b16 %v1199
        %v1273 = vunpack.c.h.b16 %v1199
        %v1274 = vunpack.c.l.b16 %v1200
        %v1275 = vunpack.c.l.b16 %v1201
        %v1276 = vunpack.c.h.b16 %v1201
        %v1277 = vunpack.c.l.b16 %v1202
        %v1278 = vunpack.c.l.b16 %v1203
        %v1279 = vunpack.c.h.b16 %v1203
        %v1280 = vunpack.c.l.b16 %v1204
        %v1281 = vunpack.c.l.b16 %v1205
        %v1282 = vunpack.c.h.b16 %v1205
        %v1283 = vunpack.c.l.b16 %v1206
        %v1284 = vunpack.c.l.b16 %v1207
        %v1285 = vunpack.c.h.b16 %v1207
        %v1286 = vunpack.c.l.b16 %v1208
        %v1287 = vunpack.c.l.b16 %v1209
        %v1288 = vunpack.c.h.b16 %v1209
        %v1289 = vunpack.c.l.b16 %v1210
        %v1290 = vunpack.c.l.b16 %v1211
        %v1291 = vunpack.c.h.b16 %v1211
        %v1292 = vunpack.c.l.b16 %v1212
        %v1293 = vpack.c.b16 %v1248, %v1245
        %v1294 = vpack.c.b16 %v1249, %v1246
        %v1295 = vpack.c.b16 %v1250, %v1247
        %v1296 = vpack.c.b16 %v1254, %v1251
        %v1297 = vpack.c.b16 %v1255, %v1252
        %v1298 = vpack.c.b16 %v1256, %v1253
        %v1299 = vpack.c.b16 %v1260, %v1257
        %v1300 = vpack.c.b16 %v1261, %v1258
        %v1301 = vpack.c.b16 %v1262, %v1259
        %v1302 = vpack.c.b16 %v1266, %v1263
        %v1303 = vpack.c.b16 %v1267, %v1264
        %v1304 = vpack.c.b16 %v1268, %v1265
        %v1305 = vpack.c.b16 %v1272, %v1269
        %v1306 = vpack.c.b16 %v1273, %v1270
        %v1307 = vpack.c.b16 %v1274, %v1271
        %v1308 = vpack.c.b16 %v1278, %v1275
        %v1309 = vpack.c.b16 %v1279, %v1276
        %v1310 = vpack.c.b16 %v1280, %v1277
        %v1311 = vpack.c.b16 %v1284, %v1281
        %v1312 = vpack.c.b16 %v1285, %v1282
        %v1313 = vpack.c.b16 %v1286, %v1283
        %v1314 = vpack.c.b16 %v1290, %v1287
        %v1315 = vpack.c.b16 %v1291, %v1288
        %v1316 = vpack.c.b16 %v1292, %v1289
        %1341 = vmatprep.subr.bf16.mxu0 %v1315
        %1342 = vmatpush1.bf16.msra.mxu0 %v1314
        %1343 = vmatprep.subr.bf16.mxu0 %v1312
        %1344 = vmatpush1.bf16.msra.mxu0 %v1311
        %1345 = vmatprep.subr.bf16.mxu0 %v1309
        %1346 = vmatpush1.bf16.msra.mxu0 %v1308
        %1347 = vmatprep.subr.bf16.mxu0 %v1306
        %1348 = vmatpush1.bf16.msra.mxu0 %v1305
        %1349 = vmatprep.subr.bf16.mxu0 %v1303
        %1350 = vmatpush1.bf16.msra.mxu0 %v1302
        %1351 = vmatprep.subr.bf16.mxu0 %v1300
        %1352 = vmatpush1.bf16.msra.mxu0 %v1299
        %1353 = vmatprep.subr.bf16.mxu0 %v1297
        %1354 = vmatpush1.bf16.msra.mxu0 %v1296
        %1355 = vmatprep.subr.bf16.mxu0 %v1294
        %1356 = vmatpush1.bf16.msra.mxu0 %v1293
        %1357 = vmatprep.subr.bf16.mxu0 0
        %1358 = vmatpush2.bf16.msra.mxu0 0
        %1359 = vmatprep.subr.bf16.mxu0 0
        %1360 = vmatpush2.bf16.msra.mxu0 0
        %1361 = vmatprep.subr.bf16.mxu0 0
        %1362 = vmatpush2.bf16.msra.mxu0 0
        %1363 = vmatprep.subr.bf16.mxu0 0
        %1364 = vmatpush2.bf16.msra.mxu0 0
        %1365 = vmatprep.subr.bf16.mxu0 0
        %1366 = vmatpush2.bf16.msra.mxu0 0
        %1367 = vmatprep.subr.bf16.mxu0 0
        %1368 = vmatpush2.bf16.msra.mxu0 0
        %1369 = vmatprep.subr.bf16.mxu0 0
        %1370 = vmatpush2.bf16.msra.mxu0 0
        %1371 = vmatprep.subr.bf16.mxu0 0
        %1372 = vmatpush2.bf16.msra.mxu0 0
        %1373 = vmatprep.mubr.bf16.mxu0 0
        %1374 = vmatmul.mubr.bf16.gmra.mxu0 %v1179
        %v1375 = vpop.f32.mrf.mxu0
        %v1376 = vadd.f32 0.0, %v1375
        %v1377 = vpop.f32.mrf.mxu0
        %v1378 = vadd.f32 0.0, %v1377
        %v1379 = vpop.f32.mrf.mxu0
        %v1380 = vpop.f32.mrf.mxu0
        %1381 = vdwg.mxu0
        %1382 = vmatprep.subr.bf16.mxu0 0
        %1383 = vmatpush1.bf16.msra.mxu0 %v1316
        %1384 = vmatprep.subr.bf16.mxu0 0
        %1385 = vmatpush1.bf16.msra.mxu0 %v1313
        %1386 = vmatprep.subr.bf16.mxu0 0
        %1387 = vmatpush1.bf16.msra.mxu0 %v1310
        %1388 = vmatprep.subr.bf16.mxu0 0
        %1389 = vmatpush1.bf16.msra.mxu0 %v1307
        %1390 = vmatprep.subr.bf16.mxu0 0
        %1391 = vmatpush1.bf16.msra.mxu0 %v1304
        %1392 = vmatprep.subr.bf16.mxu0 0
        %1393 = vmatpush1.bf16.msra.mxu0 %v1301
        %1394 = vmatprep.subr.bf16.mxu0 0
        %1395 = vmatpush1.bf16.msra.mxu0 %v1298
        %1396 = vmatprep.subr.bf16.mxu0 0
        %1397 = vmatpush1.bf16.msra.mxu0 %v1295
        %1398 = vmatprep.subr.bf16.mxu0 0
        %1399 = vmatpush2.bf16.msra.mxu0 0
        %1400 = vmatprep.subr.bf16.mxu0 0
        %1401 = vmatpush2.bf16.msra.mxu0 0
        %1402 = vmatprep.subr.bf16.mxu0 0
        %1403 = vmatpush2.bf16.msra.mxu0 0
        %1404 = vmatprep.subr.bf16.mxu0 0
        %1405 = vmatpush2.bf16.msra.mxu0 0
        %1406 = vmatprep.subr.bf16.mxu0 0
        %1407 = vmatpush2.bf16.msra.mxu0 0
        %1408 = vmatprep.subr.bf16.mxu0 0
        %1409 = vmatpush2.bf16.msra.mxu0 0
        %1410 = vmatprep.subr.bf16.mxu0 0
        %1411 = vmatpush2.bf16.msra.mxu0 0
        %1412 = vmatprep.subr.bf16.mxu0 0
        %1413 = vmatpush2.bf16.msra.mxu0 0
        %1414 = vmatprep.mubr.bf16.mxu0 0
        %1415 = vmatmul.mubr.bf16.gmra.mxu0 %v1179
        %v1416 = vpop.f32.mrf.mxu0
        %v1417 = vadd.f32 0.0, %v1416
        %v1418 = vpop.f32.mrf.mxu0
        %v1419 = vpop.f32.mrf.mxu0
        %v1420 = vpop.f32.mrf.mxu0
        %1421 = vdwg.mxu0
        %v1422 = vmul.f32 %v1378, %v323
        %v1423 = vmul.f32 %v1378, %v324
        %v1424 = vmul.f32 %v1378, %v325
        %v1425 = vmul.f32 %v1378, %v326
        %v1426 = vmul.f32 %v1417, %v323
        %v1427 = vmul.f32 %v1417, %v324
        %v1428 = vmul.f32 %v1417, %v325
        %v1429 = vmul.f32 %v1417, %v326
        %v1431 = vsel %vm605, %v1376, 0
        %v1434 = vsel %vm605, %v1422, 0
        %v1437 = vsel %vm605, %v1423, 0
        %v1440 = vsel %vm605, %v1424, 0
        %v1443 = vsel %vm605, %v1425, 0
        %1445 = vmatprep.subr.mxu0 0.0
        %1446 = vmatpush1.xpose.msra.mxu0 0.0
        %1447 = vmatprep.subr.mxu0 0.0
        %1448 = vmatpush1.xpose.msra.mxu0 0.0
        %1449 = vmatprep.subr.mxu0 0.0
        %1450 = vmatpush1.xpose.msra.mxu0 0.0
        %1451 = vmatprep.subr.mxu0 0.0
        %1452 = vmatpush1.xpose.msra.mxu0 0.0
        %1453 = vmatprep.subr.mxu0 0.0
        %1454 = vmatpush1.xpose.msra.mxu0 0.0
        %1455 = vmatprep.subr.mxu0 0.0
        %1456 = vmatpush1.xpose.msra.mxu0 0.0
        %1457 = vmatprep.subr.mxu0 0.0
        %1458 = vmatpush1.xpose.msra.mxu0 0.0
        %1459 = vmatprep.subr.mxu0 0.0
        %1460 = vmatpush1.xpose.msra.mxu0 0.0
        %1461 = vmatprep.subr.mxu0 0.0
        %1462 = vmatpush1.xpose.msra.mxu0 0.0
        %1463 = vmatprep.subr.mxu0 0.0
        %1464 = vmatpush1.xpose.msra.mxu0 0.0
        %1465 = vmatprep.subr.mxu0 0.0
        %1466 = vmatpush1.xpose.msra.mxu0 0.0
        %1467 = vmatprep.subr.mxu0 0.0
        %1468 = vmatpush1.xpose.msra.mxu0 0.0
        %1469 = vmatprep.subr.mxu0 0.0
        %1470 = vmatpush1.xpose.msra.mxu0 %v1443
        %1471 = vmatprep.subr.mxu0 0.0
        %1472 = vmatpush1.xpose.msra.mxu0 %v1440
        %1473 = vmatprep.subr.mxu0 0.0
        %1474 = vmatpush1.xpose.msra.mxu0 %v1437
        %1475 = vmatprep.subr.mxu0 0.0
        %1476 = vmatpush1.xpose.msra.mxu0 %v1434
        %1477 = vmatprep.subr.mxu0 0.0
        %1478 = vmatpush2.xpose.msra.mxu0 0.0
        %1479 = vmatprep.subr.mxu0 0.0
        %1480 = vmatpush2.xpose.msra.mxu0 0.0
        %1481 = vmatprep.subr.mxu0 0.0
        %1482 = vmatpush2.xpose.msra.mxu0 0.0
        %1483 = vmatprep.subr.mxu0 0.0
        %1484 = vmatpush2.xpose.msra.mxu0 0.0
        %1485 = vmatprep.subr.mxu0 0.0
        %1486 = vmatpush2.xpose.msra.mxu0 0.0
        %1487 = vmatprep.subr.mxu0 0.0
        %1488 = vmatpush2.xpose.msra.mxu0 0.0
        %1489 = vmatprep.subr.mxu0 0.0
        %1490 = vmatpush2.xpose.msra.mxu0 0.0
        %1491 = vmatprep.subr.mxu0 0.0
        %1492 = vmatpush2.xpose.msra.mxu0 0.0
        %1493 = vmatprep.subr.mxu0 0.0
        %1494 = vmatpush2.xpose.msra.mxu0 0.0
        %1495 = vmatprep.subr.mxu0 0.0
        %1496 = vmatpush2.xpose.msra.mxu0 0.0
        %1497 = vmatprep.subr.mxu0 0.0
        %1498 = vmatpush2.xpose.msra.mxu0 0.0
        %1499 = vmatprep.subr.mxu0 0.0
        %1500 = vmatpush2.xpose.msra.mxu0 0.0
        %1501 = vmatprep.subr.mxu0 0.0
        %1502 = vmatpush2.xpose.msra.mxu0 0.0
        %1503 = vmatprep.subr.mxu0 0.0
        %1504 = vmatpush2.xpose.msra.mxu0 0.0
        %1505 = vmatprep.subr.mxu0 0.0
        %1506 = vmatpush2.xpose.msra.mxu0 0.0
        %1507 = vmatprep.subr.mxu0 0.0
        %1508 = vmatpush2.xpose.msra.mxu0 0.0
        %1509 = vmatprep.mubr.f32.mxu0 0.0
        %1510 = vmatmul.mubr.f32.gmra.mxu0 %v1431
        %v1511 = vpop.f32.mrf.mxu0
        %v1512 = vadd.f32 0.0, %v1511
        %v1513 = vpop.f32.mrf.mxu0
        %1514 = vdwg.mxu0
        %v1515 = vmul.f32 %v1512, 0.35355338
        %v1516 = vadd.f32 %v1515, %v327
        %v1517 = vsel %vm605, %v1516, -inf
        %1518 = vmax.xlane.f32.xlu0 %v1517
        %v1519 = vpop.xlane.xlu0 %1518
        %v1520 = vsub.f32 %v1516, %v1519
        %v1521 = vmul.f32 %v1520, 1.442695
        %v1522 = vpow.pop %v1521
        %v1524 = vsel %vm605, %v1522, 0
        %1526 = vmatprep.subr.mxu0 0.0
        %1527 = vmatpush1.msra.mxu0 0.0
        %1528 = vmatprep.subr.mxu0 0.0
        %1529 = vmatpush1.msra.mxu0 0.0
        %1530 = vmatprep.subr.mxu0 0.0
        %1531 = vmatpush1.msra.mxu0 0.0
        %1532 = vmatprep.subr.mxu0 0.0
        %1533 = vmatpush1.msra.mxu0 0.0
        %1534 = vmatprep.subr.mxu0 0.0
        %1535 = vmatpush1.msra.mxu0 0.0
        %1536 = vmatprep.subr.mxu0 0.0
        %1537 = vmatpush1.msra.mxu0 0.0
        %1538 = vmatprep.subr.mxu0 0.0
        %1539 = vmatpush1.msra.mxu0 0.0
        %1540 = vmatprep.subr.mxu0 0.0
        %1541 = vmatpush1.msra.mxu0 0.0
        %1542 = vmatprep.subr.mxu0 0.0
        %1543 = vmatpush1.msra.mxu0 0.0
        %1544 = vmatprep.subr.mxu0 0.0
        %1545 = vmatpush1.msra.mxu0 0.0
        %1546 = vmatprep.subr.mxu0 0.0
        %1547 = vmatpush1.msra.mxu0 0.0
        %1548 = vmatprep.subr.mxu0 0.0
        %1549 = vmatpush1.msra.mxu0 0.0
        %1550 = vmatprep.subr.mxu0 0.0
        %1551 = vmatpush1.msra.mxu0 %v331
        %1552 = vmatprep.subr.mxu0 0.0
        %1553 = vmatpush1.msra.mxu0 %v330
        %1554 = vmatprep.subr.mxu0 0.0
        %1555 = vmatpush1.msra.mxu0 %v329
        %1556 = vmatprep.subr.mxu0 0.0
        %1557 = vmatpush1.msra.mxu0 %v328
        %1558 = vmatprep.subr.mxu0 0.0
        %1559 = vmatpush2.msra.mxu0 0.0
        %1560 = vmatprep.subr.mxu0 0.0
        %1561 = vmatpush2.msra.mxu0 0.0
        %1562 = vmatprep.subr.mxu0 0.0
        %1563 = vmatpush2.msra.mxu0 0.0
        %1564 = vmatprep.subr.mxu0 0.0
        %1565 = vmatpush2.msra.mxu0 0.0
        %1566 = vmatprep.subr.mxu0 0.0
        %1567 = vmatpush2.msra.mxu0 0.0
        %1568 = vmatprep.subr.mxu0 0.0
        %1569 = vmatpush2.msra.mxu0 0.0
        %1570 = vmatprep.subr.mxu0 0.0
        %1571 = vmatpush2.msra.mxu0 0.0
        %1572 = vmatprep.subr.mxu0 0.0
        %1573 = vmatpush2.msra.mxu0 0.0
        %1574 = vmatprep.subr.mxu0 0.0
        %1575 = vmatpush2.msra.mxu0 0.0
        %1576 = vmatprep.subr.mxu0 0.0
        %1577 = vmatpush2.msra.mxu0 0.0
        %1578 = vmatprep.subr.mxu0 0.0
        %1579 = vmatpush2.msra.mxu0 0.0
        %1580 = vmatprep.subr.mxu0 0.0
        %1581 = vmatpush2.msra.mxu0 0.0
        %1582 = vmatprep.subr.mxu0 0.0
        %1583 = vmatpush2.msra.mxu0 0.0
        %1584 = vmatprep.subr.mxu0 0.0
        %1585 = vmatpush2.msra.mxu0 0.0
        %1586 = vmatprep.subr.mxu0 0.0
        %1587 = vmatpush2.msra.mxu0 0.0
        %1588 = vmatprep.subr.mxu0 0.0
        %1589 = vmatpush2.msra.mxu0 0.0
        %1590 = vmatprep.mubr.f32.mxu0 0.0
        %1591 = vmatmul.mubr.f32.gmra.mxu0 %v1524
        %v1592 = vpop.f32.mrf.mxu0
        %v1593 = vadd.f32 0.0, %v1592
        %v1594 = vpop.f32.mrf.mxu0
        %1595 = vdwg.mxu0
        %v1596 = vrcp.pop %v1593
        %v1597 = vmul.f32 %v1522, %v1596
        %v1599 = vsel %vm605, %v1597, 0
        %1601 = vmatprep.subr.mxu0 0.0
        %1602 = vmatpush1.msra.mxu0 0.0
        %1603 = vmatprep.subr.mxu0 0.0
        %1604 = vmatpush1.msra.mxu0 0.0
        %1605 = vmatprep.subr.mxu0 0.0
        %1606 = vmatpush1.msra.mxu0 0.0
        %1607 = vmatprep.subr.mxu0 0.0
        %1608 = vmatpush1.msra.mxu0 0.0
        %1609 = vmatprep.subr.mxu0 0.0
        %1610 = vmatpush1.msra.mxu0 0.0
        %1611 = vmatprep.subr.mxu0 0.0
        %1612 = vmatpush1.msra.mxu0 0.0
        %1613 = vmatprep.subr.mxu0 0.0
        %1614 = vmatpush1.msra.mxu0 0.0
        %1615 = vmatprep.subr.mxu0 0.0
        %1616 = vmatpush1.msra.mxu0 0.0
        %1617 = vmatprep.subr.mxu0 0.0
        %1618 = vmatpush1.msra.mxu0 0.0
        %1619 = vmatprep.subr.mxu0 0.0
        %1620 = vmatpush1.msra.mxu0 0.0
        %1621 = vmatprep.subr.mxu0 0.0
        %1622 = vmatpush1.msra.mxu0 0.0
        %1623 = vmatprep.subr.mxu0 0.0
        %1624 = vmatpush1.msra.mxu0 0.0
        %1625 = vmatprep.subr.mxu0 0.0
        %1626 = vmatpush1.msra.mxu0 %v1429
        %1627 = vmatprep.subr.mxu0 0.0
        %1628 = vmatpush1.msra.mxu0 %v1428
        %1629 = vmatprep.subr.mxu0 0.0
        %1630 = vmatpush1.msra.mxu0 %v1427
        %1631 = vmatprep.subr.mxu0 0.0
        %1632 = vmatpush1.msra.mxu0 %v1426
        %1633 = vmatprep.subr.mxu0 0.0
        %1634 = vmatpush2.msra.mxu0 0.0
        %1635 = vmatprep.subr.mxu0 0.0
        %1636 = vmatpush2.msra.mxu0 0.0
        %1637 = vmatprep.subr.mxu0 0.0
        %1638 = vmatpush2.msra.mxu0 0.0
        %1639 = vmatprep.subr.mxu0 0.0
        %1640 = vmatpush2.msra.mxu0 0.0
        %1641 = vmatprep.subr.mxu0 0.0
        %1642 = vmatpush2.msra.mxu0 0.0
        %1643 = vmatprep.subr.mxu0 0.0
        %1644 = vmatpush2.msra.mxu0 0.0
        %1645 = vmatprep.subr.mxu0 0.0
        %1646 = vmatpush2.msra.mxu0 0.0
        %1647 = vmatprep.subr.mxu0 0.0
        %1648 = vmatpush2.msra.mxu0 0.0
        %1649 = vmatprep.subr.mxu0 0.0
        %1650 = vmatpush2.msra.mxu0 0.0
        %1651 = vmatprep.subr.mxu0 0.0
        %1652 = vmatpush2.msra.mxu0 0.0
        %1653 = vmatprep.subr.mxu0 0.0
        %1654 = vmatpush2.msra.mxu0 0.0
        %1655 = vmatprep.subr.mxu0 0.0
        %1656 = vmatpush2.msra.mxu0 0.0
        %1657 = vmatprep.subr.mxu0 0.0
        %1658 = vmatpush2.msra.mxu0 0.0
        %1659 = vmatprep.subr.mxu0 0.0
        %1660 = vmatpush2.msra.mxu0 0.0
        %1661 = vmatprep.subr.mxu0 0.0
        %1662 = vmatpush2.msra.mxu0 0.0
        %1663 = vmatprep.subr.mxu0 0.0
        %1664 = vmatpush2.msra.mxu0 0.0
        %1665 = vmatprep.mubr.f32.mxu0 0.0
        %1666 = vmatmul.mubr.f32.gmra.mxu0 %v1599
        %v1667 = vpop.f32.mrf.mxu0
        %v1668 = vadd.f32 0.0, %v1667
        %v1669 = vpop.f32.mrf.mxu0
        %1670 = vdwg.mxu0
        %v1671 = vpack.c.bf16 %v1668, %v1668
        %v1672 = vld [vmem:[%s1180 + $0xc] sm:$0xf]
        %v1673 = vld [vmem:[%s1180 + $0x24] sm:$0xf]
        %v1674 = vld [vmem:[%s1180 + $0x3c] sm:$0xf]
        %v1675 = vld [vmem:[%s1180 + $0x54] sm:$0xf]
        %v1680 = vunpack.c.l.b16 %v1672
        %v1681 = vunpack.c.l.b16 %v1673
        %v1682 = vunpack.c.l.b16 %v1674
        %v1683 = vunpack.c.l.b16 %v1675
        %v1684 = vpack.c.b16 %v1681, %v1680
        %v1685 = vpack.c.b16 %v1683, %v1682
        %v1689 = vsel %vm605, %v1671, 0
        %1691 = vmatprep.subr.bf16.mxu0 0
        %1692 = vmatpush1.bf16.msra.mxu0 0
        %1693 = vmatprep.subr.bf16.mxu0 0
        %1694 = vmatpush1.bf16.msra.mxu0 0
        %1695 = vmatprep.subr.bf16.mxu0 0
        %1696 = vmatpush1.bf16.msra.mxu0 0
        %1697 = vmatprep.subr.bf16.mxu0 0
        %1698 = vmatpush1.bf16.msra.mxu0 0
        %1699 = vmatprep.subr.bf16.mxu0 0
        %1700 = vmatpush1.bf16.msra.mxu0 0
        %1701 = vmatprep.subr.bf16.mxu0 0
        %1702 = vmatpush1.bf16.msra.mxu0 0
        %1703 = vmatprep.subr.bf16.mxu0 0
        %1704 = vmatpush1.bf16.msra.mxu0 %v1685
        %1705 = vmatprep.subr.bf16.mxu0 0
        %1706 = vmatpush1.bf16.msra.mxu0 %v1684
        %1707 = vmatprep.subr.bf16.mxu0 0
        %1708 = vmatpush2.bf16.msra.mxu0 0
        %1709 = vmatprep.subr.bf16.mxu0 0
        %1710 = vmatpush2.bf16.msra.mxu0 0
        %1711 = vmatprep.subr.bf16.mxu0 0
        %1712 = vmatpush2.bf16.msra.mxu0 0
        %1713 = vmatprep.subr.bf16.mxu0 0
        %1714 = vmatpush2.bf16.msra.mxu0 0
        %1715 = vmatprep.subr.bf16.mxu0 0
        %1716 = vmatpush2.bf16.msra.mxu0 0
        %1717 = vmatprep.subr.bf16.mxu0 0
        %1718 = vmatpush2.bf16.msra.mxu0 0
        %1719 = vmatprep.subr.bf16.mxu0 0
        %1720 = vmatpush2.bf16.msra.mxu0 0
        %1721 = vmatprep.subr.bf16.mxu0 0
        %1722 = vmatpush2.bf16.msra.mxu0 0
        %1723 = vmatprep.mubr.bf16.mxu0 0
        %1724 = vmatmul.mubr.bf16.gmra.mxu0 %v1689
        %v1725 = vpop.f32.mrf.mxu0
        %v1726 = vadd.f32 0.0, %v1725
        %v1727 = vpop.f32.mrf.mxu0
        %v1728 = vpop.f32.mrf.mxu0
        %v1729 = vpop.f32.mrf.mxu0
        %1730 = vdwg.mxu0
        %v1731 = vadd.f32 %v1154, %v1726
        %v1732 = vlaneseq
        %v1733 = vshrl.u32 %v1732, 7
        %v1734 = vsub.s32 4, %v1733
        %v1735 = vrot.slane %v1156, %v1734
        %v1736 = vadd.f32 %v1731, %v1735
        %1737 = vadd.xlane.f32.xlu0 %v1736
        %v1738 = vpop.xlane.xlu0 %1737
        %v1739 = vmul.f32 %v1738, 0.03125
        %v1740 = vsub.f32 %v1736, %v1739
        %v1741 = vmul.f32 %v1740, %v322
        %v1742 = vmul.f32 %v1741, %v1741
        %1743 = vadd.xlane.f32.xlu0 %v1742
        %v1744 = vpop.xlane.xlu0 %1743
        %v1745 = vmul.f32 %v1744, 0.03125
        %v1746 = vadd.f32 %v1745, 1e-05
        %v1747 = vrsqrt.pop %v1746
        %v1748 = vmul.f32 %v1741, %v1747
        %v1749 = vlaneseq
        %v1750 = vshrl.u32 %v1749, 7
        %v1751 = vsub.s32 2, %v1750
        %v1752 = vrot.slane %v1156, %v1751
        %v1753 = vmul.f32 %v1748, %v1752
        %v1754 = vlaneseq
        %v1755 = vshrl.u32 %v1754, 7
        %v1756 = vsub.s32 3, %v1755
        %v1757 = vrot.slane %v1156, %v1756
        %v1758 = vadd.f32 %v1753, %v1757
        %v1759 = vpack.c.bf16 %v1758, %v1758
        %v1760 = vld [vmem:[%s1180 + $0x10] sm:$0xf]
        %v1761 = vld [vmem:[%s1180 + $0x28] sm:$0xf]
        %v1762 = vld [vmem:[%s1180 + $0x40] sm:$0xf]
        %v1763 = vld [vmem:[%s1180 + $0x58] sm:$0xf]
        %v1764 = vld [vmem:[%s1180 + $0x70] sm:$0xf]
        %v1765 = vld [vmem:[%s1180 + $0x88] sm:$0xf]
        %v1766 = vld [vmem:[%s1180 + $0xa0] sm:$0xf]
        %v1767 = vld [vmem:[%s1180 + $0xb8] sm:$0xf]
        %v1768 = vld [vmem:[%s1180 + $0xd0] sm:$0xf]
        %v1769 = vld [vmem:[%s1180 + $0xe8] sm:$0xf]
        %v1770 = vld [vmem:[%s1180 + $0x100] sm:$0xf]
        %v1771 = vld [vmem:[%s1180 + $0x118] sm:$0xf]
        %v1772 = vld [vmem:[%s1180 + $0x130] sm:$0xf]
        %v1773 = vld [vmem:[%s1180 + $0x148] sm:$0xf]
        %v1774 = vld [vmem:[%s1180 + $0x160] sm:$0xf]
        %v1775 = vld [vmem:[%s1180 + $0x178] sm:$0xf]
        %v1776 = vlaneseq
        %v1777 = vshrl.u32 %v1776, 7
        %v1778 = vsub.s32 5, %v1777
        %v1779 = vrot.slane %v1156, %v1778
        %v1796 = vunpack.c.l.b16 %v1760
        %v1797 = vunpack.c.l.b16 %v1761
        %v1798 = vunpack.c.l.b16 %v1762
        %v1799 = vunpack.c.l.b16 %v1763
        %v1800 = vunpack.c.l.b16 %v1764
        %v1801 = vunpack.c.l.b16 %v1765
        %v1802 = vunpack.c.l.b16 %v1766
        %v1803 = vunpack.c.l.b16 %v1767
        %v1804 = vunpack.c.l.b16 %v1768
        %v1805 = vunpack.c.l.b16 %v1769
        %v1806 = vunpack.c.l.b16 %v1770
        %v1807 = vunpack.c.l.b16 %v1771
        %v1808 = vunpack.c.l.b16 %v1772
        %v1809 = vunpack.c.l.b16 %v1773
        %v1810 = vunpack.c.l.b16 %v1774
        %v1811 = vunpack.c.l.b16 %v1775
        %v1812 = vpack.c.b16 %v1797, %v1796
        %v1813 = vpack.c.b16 %v1799, %v1798
        %v1814 = vpack.c.b16 %v1801, %v1800
        %v1815 = vpack.c.b16 %v1803, %v1802
        %v1816 = vpack.c.b16 %v1805, %v1804
        %v1817 = vpack.c.b16 %v1807, %v1806
        %v1818 = vpack.c.b16 %v1809, %v1808
        %v1819 = vpack.c.b16 %v1811, %v1810
        %1828 = vmatprep.subr.bf16.mxu0 0
        %1829 = vmatpush1.bf16.msra.mxu0 %v1819
        %1830 = vmatprep.subr.bf16.mxu0 0
        %1831 = vmatpush1.bf16.msra.mxu0 %v1818
        %1832 = vmatprep.subr.bf16.mxu0 0
        %1833 = vmatpush1.bf16.msra.mxu0 %v1817
        %1834 = vmatprep.subr.bf16.mxu0 0
        %1835 = vmatpush1.bf16.msra.mxu0 %v1816
        %1836 = vmatprep.subr.bf16.mxu0 0
        %1837 = vmatpush1.bf16.msra.mxu0 %v1815
        %1838 = vmatprep.subr.bf16.mxu0 0
        %1839 = vmatpush1.bf16.msra.mxu0 %v1814
        %1840 = vmatprep.subr.bf16.mxu0 0
        %1841 = vmatpush1.bf16.msra.mxu0 %v1813
        %1842 = vmatprep.subr.bf16.mxu0 0
        %1843 = vmatpush1.bf16.msra.mxu0 %v1812
        %1844 = vmatprep.subr.bf16.mxu0 0
        %1845 = vmatpush2.bf16.msra.mxu0 0
        %1846 = vmatprep.subr.bf16.mxu0 0
        %1847 = vmatpush2.bf16.msra.mxu0 0
        %1848 = vmatprep.subr.bf16.mxu0 0
        %1849 = vmatpush2.bf16.msra.mxu0 0
        %1850 = vmatprep.subr.bf16.mxu0 0
        %1851 = vmatpush2.bf16.msra.mxu0 0
        %1852 = vmatprep.subr.bf16.mxu0 0
        %1853 = vmatpush2.bf16.msra.mxu0 0
        %1854 = vmatprep.subr.bf16.mxu0 0
        %1855 = vmatpush2.bf16.msra.mxu0 0
        %1856 = vmatprep.subr.bf16.mxu0 0
        %1857 = vmatpush2.bf16.msra.mxu0 0
        %1858 = vmatprep.subr.bf16.mxu0 0
        %1859 = vmatpush2.bf16.msra.mxu0 0
        %1860 = vmatprep.mubr.bf16.mxu0 0
        %1861 = vmatmul.mubr.bf16.gmra.mxu0 %v1759
        %v1862 = vpop.f32.mrf.mxu0
        %v1863 = vadd.f32 %v1779, %v1862
        %v1864 = vpop.f32.mrf.mxu0
        %v1865 = vpop.f32.mrf.mxu0
        %v1866 = vpop.f32.mrf.mxu0
        %1867 = vdwg.mxu0
        %v1868 = vmax.f32 %v1863, 0.0
        %v1869 = vpack.c.bf16 %v1868, %v1868
        %v1870 = vld [vmem:[%s1180 + $0x14] sm:$0xf]
        %v1871 = vld [vmem:[%s1180 + $0x2c] sm:$0xf]
        %v1872 = vld [vmem:[%s1180 + $0x44] sm:$0xf]
        %v1873 = vld [vmem:[%s1180 + $0x5c] sm:$0xf]
        %v1874 = vld [vmem:[%s1180 + $0x74] sm:$0xf]
        %v1875 = vld [vmem:[%s1180 + $0x8c] sm:$0xf]
        %v1876 = vld [vmem:[%s1180 + $0xa4] sm:$0xf]
        %v1877 = vld [vmem:[%s1180 + $0xbc] sm:$0xf]
        %v1878 = vld [vmem:[%s1180 + $0xd4] sm:$0xf]
        %v1879 = vld [vmem:[%s1180 + $0xec] sm:$0xf]
        %v1880 = vld [vmem:[%s1180 + $0x104] sm:$0xf]
        %v1881 = vld [vmem:[%s1180 + $0x11c] sm:$0xf]
        %v1882 = vld [vmem:[%s1180 + $0x134] sm:$0xf]
        %v1883 = vld [vmem:[%s1180 + $0x14c] sm:$0xf]
        %v1884 = vld [vmem:[%s1180 + $0x164] sm:$0xf]
        %v1885 = vld [vmem:[%s1180 + $0x17c] sm:$0xf]
        %v1886 = vlaneseq
        %v1887 = vshrl.u32 %v1886, 7
        %v1888 = vsub.s32 6, %v1887
        %v1889 = vrot.slane %v1156, %v1888
        %v1906 = vunpack.c.l.b16 %v1870
        %v1907 = vunpack.c.l.b16 %v1871
        %v1908 = vunpack.c.l.b16 %v1872
        %v1909 = vunpack.c.l.b16 %v1873
        %v1910 = vunpack.c.l.b16 %v1874
        %v1911 = vunpack.c.l.b16 %v1875
        %v1912 = vunpack.c.l.b16 %v1876
        %v1913 = vunpack.c.l.b16 %v1877
        %v1914 = vunpack.c.l.b16 %v1878
        %v1915 = vunpack.c.l.b16 %v1879
        %v1916 = vunpack.c.l.b16 %v1880
        %v1917 = vunpack.c.l.b16 %v1881
        %v1918 = vunpack.c.l.b16 %v1882
        %v1919 = vunpack.c.l.b16 %v1883
        %v1920 = vunpack.c.l.b16 %v1884
        %v1921 = vunpack.c.l.b16 %v1885
        %v1922 = vpack.c.b16 %v1907, %v1906
        %v1923 = vpack.c.b16 %v1909, %v1908
        %v1924 = vpack.c.b16 %v1911, %v1910
        %v1925 = vpack.c.b16 %v1913, %v1912
        %v1926 = vpack.c.b16 %v1915, %v1914
        %v1927 = vpack.c.b16 %v1917, %v1916
        %v1928 = vpack.c.b16 %v1919, %v1918
        %v1929 = vpack.c.b16 %v1921, %v1920
        %1938 = vmatprep.subr.bf16.mxu0 0
        %1939 = vmatpush1.bf16.msra.mxu0 %v1929
        %1940 = vmatprep.subr.bf16.mxu0 0
        %1941 = vmatpush1.bf16.msra.mxu0 %v1928
        %1942 = vmatprep.subr.bf16.mxu0 0
        %1943 = vmatpush1.bf16.msra.mxu0 %v1927
        %1944 = vmatprep.subr.bf16.mxu0 0
        %1945 = vmatpush1.bf16.msra.mxu0 %v1926
        %1946 = vmatprep.subr.bf16.mxu0 0
        %1947 = vmatpush1.bf16.msra.mxu0 %v1925
        %1948 = vmatprep.subr.bf16.mxu0 0
        %1949 = vmatpush1.bf16.msra.mxu0 %v1924
        %1950 = vmatprep.subr.bf16.mxu0 0
        %1951 = vmatpush1.bf16.msra.mxu0 %v1923
        %1952 = vmatprep.subr.bf16.mxu0 0
        %1953 = vmatpush1.bf16.msra.mxu0 %v1922
        %1954 = vmatprep.subr.bf16.mxu0 0
        %1955 = vmatpush2.bf16.msra.mxu0 0
        %1956 = vmatprep.subr.bf16.mxu0 0
        %1957 = vmatpush2.bf16.msra.mxu0 0
        %1958 = vmatprep.subr.bf16.mxu0 0
        %1959 = vmatpush2.bf16.msra.mxu0 0
        %1960 = vmatprep.subr.bf16.mxu0 0
        %1961 = vmatpush2.bf16.msra.mxu0 0
        %1962 = vmatprep.subr.bf16.mxu0 0
        %1963 = vmatpush2.bf16.msra.mxu0 0
        %1964 = vmatprep.subr.bf16.mxu0 0
        %1965 = vmatpush2.bf16.msra.mxu0 0
        %1966 = vmatprep.subr.bf16.mxu0 0
        %1967 = vmatpush2.bf16.msra.mxu0 0
        %1968 = vmatprep.subr.bf16.mxu0 0
        %1969 = vmatpush2.bf16.msra.mxu0 0
        %1970 = vmatprep.mubr.bf16.mxu0 0
        %1971 = vmatmul.mubr.bf16.gmra.mxu0 %v1869
        %v1972 = vpop.f32.mrf.mxu0
        %v1973 = vadd.f32 %v1889, %v1972
        %v1974 = vpop.f32.mrf.mxu0
        %v1975 = vpop.f32.mrf.mxu0
        %v1976 = vpop.f32.mrf.mxu0
        %1977 = vdwg.mxu0
        %v1978 = vadd.f32 %v1736, %v1973
        %v1979 = vld [vmem:[%s4] sm:$0xff]
        %1980 = vadd.xlane.f32.xlu0 %v1978
        %v1981 = vpop.xlane.xlu0 %1980
        %v1982 = vmul.f32 %v1981, 0.03125
        %v1983 = vsub.f32 %v1978, %v1982
        %v1984 = vmul.f32 %v1983, %v322
        %v1985 = vmul.f32 %v1984, %v1984
        %1986 = vadd.xlane.f32.xlu0 %v1985
        %v1987 = vpop.xlane.xlu0 %1986
        %v1988 = vmul.f32 %v1987, 0.03125
        %v1989 = vadd.f32 %v1988, 1e-05
        %v1990 = vrsqrt.pop %v1989
        %v1991 = vmul.f32 %v1984, %v1990
        %v1992 = vlaneseq
        %v1993 = vshrl.u32 %v1992, 7
        %v1994 = vsub.s32 0, %v1993
        %v1995 = vrot.slane %v1979, %v1994
        %v1996 = vmul.f32 %v1991, %v1995
        %v1997 = vlaneseq
        %v1998 = vshrl.u32 %v1997, 7
        %v1999 = vsub.s32 1, %v1998
        %v2000 = vrot.slane %v1979, %v1999
        %v2001 = vadd.f32 %v1996, %v2000
        %v2002 = vpack.c.bf16 %v2001, %v2001
        %v2003 = vld [vmem:[%s3] sm:$0xf]
        %v2004 = vld [vmem:[%s3 + $0x4] sm:$0xf]
        %v2005 = vld [vmem:[%s3 + $0x8] sm:$0xf]
        %v2006 = vld [vmem:[%s3 + $0xc] sm:$0xf]
        %v2007 = vld [vmem:[%s3 + $0x10] sm:$0xf]
        %v2008 = vld [vmem:[%s3 + $0x14] sm:$0xf]
        %v2009 = vld [vmem:[%s3 + $0x18] sm:$0xf]
        %v2010 = vld [vmem:[%s3 + $0x1c] sm:$0xf]
        %v2011 = vld [vmem:[%s3 + $0x20] sm:$0xf]
        %v2012 = vld [vmem:[%s3 + $0x24] sm:$0xf]
        %v2013 = vld [vmem:[%s3 + $0x28] sm:$0xf]
        %v2014 = vld [vmem:[%s3 + $0x2c] sm:$0xf]
        %v2015 = vld [vmem:[%s3 + $0x30] sm:$0xf]
        %v2016 = vld [vmem:[%s3 + $0x34] sm:$0xf]
        %v2017 = vld [vmem:[%s3 + $0x38] sm:$0xf]
        %v2018 = vld [vmem:[%s3 + $0x3c] sm:$0xf]
        %v2019 = vlaneseq
        %v2020 = vshrl.u32 %v2019, 7
        %v2021 = vsub.s32 2, %v2020
        %v2022 = vrot.slane %v1979, %v2021
        %v2039 = vunpack.c.l.b16 %v2003
        %v2040 = vunpack.c.l.b16 %v2004
        %v2041 = vunpack.c.l.b16 %v2005
        %v2042 = vunpack.c.l.b16 %v2006
        %v2043 = vunpack.c.l.b16 %v2007
        %v2044 = vunpack.c.l.b16 %v2008
        %v2045 = vunpack.c.l.b16 %v2009
        %v2046 = vunpack.c.l.b16 %v2010
        %v2047 = vunpack.c.l.b16 %v2011
        %v2048 = vunpack.c.l.b16 %v2012
        %v2049 = vunpack.c.l.b16 %v2013
        %v2050 = vunpack.c.l.b16 %v2014
        %v2051 = vunpack.c.l.b16 %v2015
        %v2052 = vunpack.c.l.b16 %v2016
        %v2053 = vunpack.c.l.b16 %v2017
        %v2054 = vunpack.c.l.b16 %v2018
        %v2055 = vpack.c.b16 %v2040, %v2039
        %v2056 = vpack.c.b16 %v2042, %v2041
        %v2057 = vpack.c.b16 %v2044, %v2043
        %v2058 = vpack.c.b16 %v2046, %v2045
        %v2059 = vpack.c.b16 %v2048, %v2047
        %v2060 = vpack.c.b16 %v2050, %v2049
        %v2061 = vpack.c.b16 %v2052, %v2051
        %v2062 = vpack.c.b16 %v2054, %v2053
        %2071 = vmatprep.subr.bf16.mxu0 0
        %2072 = vmatpush1.bf16.msra.mxu0 %v2062
        %2073 = vmatprep.subr.bf16.mxu0 0
        %2074 = vmatpush1.bf16.msra.mxu0 %v2061
        %2075 = vmatprep.subr.bf16.mxu0 0
        %2076 = vmatpush1.bf16.msra.mxu0 %v2060
        %2077 = vmatprep.subr.bf16.mxu0 0
        %2078 = vmatpush1.bf16.msra.mxu0 %v2059
        %2079 = vmatprep.subr.bf16.mxu0 0
        %2080 = vmatpush1.bf16.msra.mxu0 %v2058
        %2081 = vmatprep.subr.bf16.mxu0 0
        %2082 = vmatpush1.bf16.msra.mxu0 %v2057
        %2083 = vmatprep.subr.bf16.mxu0 0
        %2084 = vmatpush1.bf16.msra.mxu0 %v2056
        %2085 = vmatprep.subr.bf16.mxu0 0
        %2086 = vmatpush1.bf16.msra.mxu0 %v2055
        %2087 = vmatprep.subr.bf16.mxu0 0
        %2088 = vmatpush2.bf16.msra.mxu0 0
        %2089 = vmatprep.subr.bf16.mxu0 0
        %2090 = vmatpush2.bf16.msra.mxu0 0
        %2091 = vmatprep.subr.bf16.mxu0 0
        %2092 = vmatpush2.bf16.msra.mxu0 0
        %2093 = vmatprep.subr.bf16.mxu0 0
        %2094 = vmatpush2.bf16.msra.mxu0 0
        %2095 = vmatprep.subr.bf16.mxu0 0
        %2096 = vmatpush2.bf16.msra.mxu0 0
        %2097 = vmatprep.subr.bf16.mxu0 0
        %2098 = vmatpush2.bf16.msra.mxu0 0
        %2099 = vmatprep.subr.bf16.mxu0 0
        %2100 = vmatpush2.bf16.msra.mxu0 0
        %2101 = vmatprep.subr.bf16.mxu0 0
        %2102 = vmatpush2.bf16.msra.mxu0 0
        %2103 = vmatprep.mubr.bf16.mxu0 0
        %2104 = vmatmul.mubr.bf16.gmra.mxu0 %v2002
        %v2105 = vpop.f32.mrf.mxu0
        %v2106 = vadd.f32 %v2022, %v2105
        %v2107 = vpop.f32.mrf.mxu0
        %v2108 = vpop.f32.mrf.mxu0
        %v2109 = vpop.f32.mrf.mxu0
        %2110 = vdwg.mxu0
        %2111 = vst [vmem:[%s311] sm:$0xff] %v2106
        %s2112 = sand.u32 %s204, 1
        %s2113 = scalar_lea.sflag [#allocation4], %s2112
        %s2114 = sand.u32 %s204, 1
        %s2115 = smul.addr %s2114, 8
        %s2116 = scalar_lea.vmem [#allocation5], %s2115
        // Predicated region
        $region57: #{gpt_forward.1} parent=51 // pred_check
          %p2117 = pneg %p214
        $region58: #{gpt_forward.1} parent=51 // pred_check_branch
          %2119 = sbr.rel (%p2117) target = $region60
        $region59: #{gpt_forward.1} parent=51 // pred_region
          %s2121 = ssub.s32 128, 128
          %2122 = vsyncadd %s2113, %s2121
          %s2123 = smul.addr %s23, 128
          %s2124 = scalar_lea.hbm %s8, %s2123
          %s2126 = sshll.u32 %s2116, 4
          %s2127 = int_to_ptr.vmem [resolvable:$true] %s2126
          %2129 = dma.vmem_to_hbm [thread:$0]  %s2127, 128, %s2124, %s2113
        $region60: #{gpt_forward.1} parent=51 // pred_fallthru
          _
      $region52: #{gpt_forward.1} parent=5 // pred_fallthru
        _
      %p2130 = scmp.le.s32.totalorder 2, %s18
      // Predicated region
      $region61: #{gpt_forward.1} parent=5 // pred_check
        %p2131 = pneg %p2130
      $region62: #{gpt_forward.1} parent=5 // pred_check_branch
        %2133 = sbr.rel (%p2131) target = $region64
      $region63: #{gpt_forward.1} parent=5 // pred_region
        %s2134 = ssub.s32 %s18, 2
        // Predicated region
        $region65: #{gpt_forward.1} parent=63 // pred_check
          %p2135 = pneg %p220
        $region66: #{gpt_forward.1} parent=63 // pred_check_branch
          %2137 = sbr.rel (%p2135) target = $region68
        $region67: #{gpt_forward.1} parent=63 // pred_region
          %s2138 = sand.u32 %s205, 1
          %s2139 = scalar_lea.sflag [#allocation4], %s2138
          %s2140 = sand.u32 %s205, 1
          %s2141 = smul.addr %s2140, 8
          %s2142 = scalar_lea.vmem [#allocation5], %s2141
          %2143 = dma.done %s2139, 128
        $region68: #{gpt_forward.1} parent=63 // pred_fallthru
          _
      $region64: #{gpt_forward.1} parent=5 // pred_fallthru
        _
    $region6: #{gpt_forward.1} parent=1 // loop_footer
      %s22 = sadd.s32 1, %s18
    $region7: #{gpt_forward.1} parent=1 // loop_footer_branch
      %17 = sbr.rel target = $region3
    $region8: #{gpt_forward.1} parent=1 // loop_exit
      _
    %2144 = vsyncpa [#allocation3], 1
    %s2145 = scalar_lea.sflag [#allocation3], 1
    %2146 = vsyncpa %s2145, 1
    %2147 = vsyncpa [#allocation4], 1
    %s2148 = scalar_lea.sflag [#allocation4], 1
    %2149 = vsyncpa %s2148, 1

</llo_original>
